<compile_context>
chip_gen: v7x
topology: tpu7x:2x2x1
jax: 0.10.0
libtpu: 0.0.40
codegen_flags: <defaults>
</compile_context>

<pallas_src>
import functools

import jax
import jax.numpy as jnp
from jax import lax
from jax.experimental import pallas as pl
from jax.experimental.pallas import tpu as pltpu


def _round_up(x, m):
    return ((x + m - 1) // m) * m


def _pad_last_to(x, multiple=128):
    pad = (-x.shape[-1]) % multiple
    if pad == 0:
        return x
    cfg = [(0, 0)] * (x.ndim - 1) + [(0, pad)]
    return jnp.pad(x, cfg)


def _pad_axis_to(x, axis, target):
    pad = target - x.shape[axis]
    if pad == 0:
        return x
    cfg = [(0, 0)] * x.ndim
    cfg[axis] = (0, pad)
    return jnp.pad(x, cfg)


# --------------------------------------------------------------------------- #
# Pallas kernel 1: pointwise (1x1) convolution as a row-tiled matmul           #
#   - channel dims kept at their natural (tiny) width (full-extent blocks)     #
#   - rows tiled -> software-pipelined DMA, "parallel" for megacore sharding   #
# --------------------------------------------------------------------------- #
def _pw_conv_kernel(x_ref, w_ref, b_ref, o_ref):
    o_ref[...] = (
        jnp.dot(x_ref[...], w_ref[...], preferred_element_type=jnp.float32)
        + b_ref[...]
    )


def pointwise_conv(x, w, b, *, tile_n=512):
    """x: [N, Cin], w: [Cin, Cout], b: [Cout] -> [N, Cout] (float32)."""
    n, cin = x.shape
    cout = w.shape[1]
    tile = n if n <= tile_n else tile_n          # tile_n is a multiple of 8
    grid = (pl.cdiv(n, tile),)

    return pl.pallas_call(
        _pw_conv_kernel,
        out_shape=jax.ShapeDtypeStruct((n, cout), jnp.float32),
        grid=grid,
        in_specs=[
            pl.BlockSpec((tile, cin), lambda i: (i, 0)),
            pl.BlockSpec((cin, cout), lambda i: (0, 0)),
            pl.BlockSpec((1, cout), lambda i: (0, 0)),
        ],
        out_specs=pl.BlockSpec((tile, cout), lambda i: (i, 0)),
        compiler_params=pltpu.CompilerParams(dimension_semantics=("parallel",)),
    )(x.astype(jnp.float32), w.astype(jnp.float32),
      b.reshape(1, cout).astype(jnp.float32))


# --------------------------------------------------------------------------- #
# Pallas kernel 2: guided contextual attention, flash-style tiled              #
#   per (batch, q-tile, k-tile):                                               #
#     - L2-normalise the key guidance patches, fold in softmax_scale           #
#     - S_tile = Pq . Pk_n^T via dot_general (no transpose materialised)       #
#     - self mask (-1e4 on the global diagonal; the "unknown" map is all-ones  #
#       in the reference) + padded-key mask (trace-time skipped if L % tile=0) #
#     - online softmax over the key axis (running m, l in scratch; the f32     #
#       accumulator is the resident output block itself)                       #
#     - out += softmax_probs(bf16) @ AW_tile(bf16), f32 accumulation           #
#     - on the last k tile: Y = out / l / 4                                    #
# --------------------------------------------------------------------------- #
def _attn_kernel(pq_ref, pk_ref, aw_ref, o_ref, m_ref, l_ref, *,
                 softmax_scale, l_valid, mask_padded_keys):
    qi = pl.program_id(1)
    ki = pl.program_id(2)

    @pl.when(ki == 0)
    def _():
        m_ref[...] = jnp.full_like(m_ref, -jnp.inf)
        l_ref[...] = jnp.zeros_like(l_ref)
        o_ref[...] = jnp.zeros_like(o_ref)

    Pq = pq_ref[0]                                 # [Tq, K1p] f32
    Pk = pk_ref[0]                                 # [Tk, K1p] f32
    tq, tk = Pq.shape[0], Pk.shape[0]

    # key-patch L2 normalisation (escape_NaN = 1e-4) with softmax_scale folded in.
    # 1 / max(sqrt(ss), 1e-4) == where(ss > 1e-8, rsqrt(ss), 1e4)  (rsqrt -> EUP)
    sumsq = jnp.sum(Pk * Pk, axis=1, keepdims=True)                 # [Tk, 1]
    inv_norm = jnp.where(sumsq > 1e-8, lax.rsqrt(sumsq), 1e4)
    Pk_n = Pk * (inv_norm * softmax_scale)

    # correlation tile: contract the last dims directly (== per-batch F.conv2d)
    S = lax.dot_general(Pq, Pk_n, (((1,), (1,)), ((), ())),
                        preferred_element_type=jnp.float32)         # [Tq, Tk]

    row_l = lax.broadcasted_iota(jnp.int32, (tq, tk), 0)
    col_l = lax.broadcasted_iota(jnp.int32, (tq, tk), 1)
    # the global diagonal only intersects tiles with qi == ki (equal tile sizes)
    S = jnp.where(jnp.logical_and(qi == ki, row_l == col_l), S - 10000.0, S)
    if mask_padded_keys:                           # trace-time skip when L % tile == 0
        S = jnp.where(ki * tk + col_l < l_valid, S, -1e30)

    # online softmax over the key (patch) axis; accumulator = resident output block
    m_prev = m_ref[...]
    m_new = jnp.maximum(m_prev, jnp.max(S, axis=1, keepdims=True))
    corr = jnp.exp(m_prev - m_new)
    p = jnp.exp(S - m_new)
    l_ref[...] = corr * l_ref[...] + jnp.sum(p, axis=1, keepdims=True)
    o_ref[0] = corr * o_ref[0] + jnp.dot(
        p.astype(jnp.bfloat16), aw_ref[0], preferred_element_type=jnp.float32)
    m_ref[...] = m_new

    @pl.when(ki == pl.num_programs(2) - 1)
    def _():
        o_ref[0] = o_ref[0] * (pl.reciprocal(l_ref[...], approx=True) * 0.25)


def attention_patches(P, AW, softmax_scale=1.0, *, tile_l=128):
    """P: [B, L, K1] guidance patches, AW: [B, L, K2] alpha patches -> Y: [B, L, K2]."""
    B, L, _ = P.shape
    K2 = AW.shape[2]

    tile = min(tile_l, _round_up(L, 8))            # multiple of 8
    Lp = _round_up(L, tile)

    Pp = _pad_axis_to(_pad_last_to(P.astype(jnp.float32)), 1, Lp)    # [B, Lp, K1p]
    AWp = _pad_axis_to(_pad_last_to(AW.astype(jnp.float32)), 1, Lp)  # [B, Lp, K2p]
    AWp = AWp.astype(jnp.bfloat16)                 # halved DMA; f32 accumulation in-kernel
    K1p, K2p = Pp.shape[2], AWp.shape[2]
    n_tiles = Lp // tile

    kern = functools.partial(_attn_kernel,
                             softmax_scale=float(softmax_scale),
                             l_valid=L,
                             mask_padded_keys=(Lp != L))
    Y = pl.pallas_call(
        kern,
        out_shape=jax.ShapeDtypeStruct((B, Lp, K2p), jnp.float32),
        grid=(B, n_tiles, n_tiles),
        in_specs=[
            pl.BlockSpec((1, tile, K1p), lambda b, qi, ki: (b, qi, 0)),   # query patches
            pl.BlockSpec((1, tile, K1p), lambda b, qi, ki: (b, ki, 0)),   # key patches
            pl.BlockSpec((1, tile, K2p), lambda b, qi, ki: (b, ki, 0)),   # alpha patches
        ],
        out_specs=pl.BlockSpec((1, tile, K2p), lambda b, qi, ki: (b, qi, 0)),
        scratch_shapes=[
            pltpu.VMEM((tile, 1), jnp.float32),    # running max m
            pltpu.VMEM((tile, 1), jnp.float32),    # running sum l
        ],
        compiler_params=pltpu.CompilerParams(
            dimension_semantics=("parallel", "parallel", "arbitrary")),
    )(Pp, Pp, AWp)
    return Y[:, :L, :K2]


# --------------------------------------------------------------------------- #
# Full forward (wrapper / glue)                                                #
# --------------------------------------------------------------------------- #
def guided_cxt_atten(f, alpha, params, rate=2, ksize=3, softmax_scale=1.0,
                     attn_tile=128):
    """f: [B, Cg, H, W] (NCHW), alpha: [B, Ca, H, W] (NCHW) -> [B, Ca, H, W]."""
    B, Cg, H, W = f.shape
    _, Ca, _, _ = alpha.shape
    Cg2 = params["g_w"].shape[1]

    # guidance_conv: 1x1 conv (Pallas row-tiled matmul), bias initialised to 0
    f_flat = jnp.transpose(f, (0, 2, 3, 1)).reshape(B * H * W, Cg)
    g = pointwise_conv(f_flat, params["g_w"], params["g_b"]).reshape(B, H, W, Cg2)

    # F.interpolate(scale=1/rate, mode='nearest')  ->  pick every rate-th pixel
    gd = g[:, ::rate, ::rate, :]
    Hs, Ws = H // rate, W // rate
    L = Hs * Ws

    # extract 3x3 / stride-1 patches of downsampled guidance (reflect pad 1)
    # TODO(synk): patches are still duplicated 9x in HBM; could be formed in VMEM.
    gd_pad = jnp.pad(gd, ((0, 0), (1, 1), (1, 1), (0, 0)), mode="reflect")
    P = jnp.stack(
        [gd_pad[:, p:p + Hs, q:q + Ws, :] for p in range(ksize) for q in range(ksize)],
        axis=3,
    )                                                        # [B, Hs, Ws, 9, Cg2]
    P = P.reshape(B, L, ksize * ksize * Cg2)

    # extract (2*rate)x(2*rate) / stride-rate patches of alpha (reflect pad 1)
    kernel = 2 * rate
    a_nhwc = jnp.transpose(alpha, (0, 2, 3, 1))
    a_pad = jnp.pad(a_nhwc, ((0, 0), (1, 1), (1, 1), (0, 0)), mode="reflect")
    aw = jnp.stack(
        [a_pad[:, p:p + rate * Hs:rate, q:q + rate * Ws:rate, :]
         for p in range(kernel) for q in range(kernel)],
        axis=3,
    )                                                        # [B, Hs, Ws, k*k, Ca]
    AW = jnp.transpose(aw, (0, 1, 2, 4, 3)).reshape(B, L, Ca * kernel * kernel)

    # Pallas flash-style attention (correlation + masked online softmax + mixing, /4)
    Y = attention_patches(P, AW, softmax_scale, tile_l=attn_tile)   # [B, L, Ca*k*k]

    # overlap-add scatter == F.conv_transpose2d(stride=rate, padding=1)
    Yp = Y.reshape(B, Hs, Ws, Ca, kernel, kernel)
    Yp = jnp.transpose(Yp, (0, 1, 2, 4, 5, 3))               # [B, i, j, p, q, c]
    canvas = jnp.zeros((B, Hs + 1, rate, Ws + 1, rate, Ca), jnp.float32)
    for p in range(kernel):
        for q in range(kernel):
            a, r = divmod(p, rate)
            b2, s = divmod(q, rate)
            canvas = canvas.at[:, a:a + Hs, r, b2:b2 + Ws, s, :].add(Yp[:, :, :, p, q, :])
    y_full = canvas.reshape(B, rate * (Hs + 1), rate * (Ws + 1), Ca)
    y_att = y_full[:, 1:H + 1, 1:W + 1, :]                   # [B, H, W, Ca]

    # self.W: 1x1 conv (Pallas row-tiled matmul, no bias) + BatchNorm2d + residual
    z = pointwise_conv(
        y_att.reshape(B * H * W, Ca), params["w_w"], jnp.zeros((Ca,), jnp.float32)
    ).reshape(B, H, W, Ca)
    # BatchNorm2d in training mode (module default): batch statistics, eps=1e-5.
    # TODO(synk): running-mean/var buffer updates (stateful) are not modeled;
    #             they do not affect this forward output in training mode.
    mean = jnp.mean(z, axis=(0, 1, 2))
    var = jnp.var(z, axis=(0, 1, 2))
    z_bn = (z - mean) / jnp.sqrt(var + 1e-5) * params["bn_w"] + params["bn_b"]

    out = z_bn + a_nhwc
    return jnp.transpose(out, (0, 3, 1, 2))                  # back to NCHW


def init_params(key, out_channels, guidance_channels):
    """Deterministic init matching the module's __init__ (xavier_uniform / constants)."""
    Cg, Ca = guidance_channels, out_channels
    Cg2 = Cg // 2
    k1, k2 = jax.random.split(key)
    bound_g = (6.0 / (Cg + Cg2)) ** 0.5
    bound_w = (6.0 / (Ca + Ca)) ** 0.5
    return dict(
        g_w=jax.random.uniform(k1, (Cg, Cg2), jnp.float32, -bound_g, bound_g),
        g_b=jnp.zeros((Cg2,), jnp.float32),
        w_w=jax.random.uniform(k2, (Ca, Ca), jnp.float32, -bound_w, bound_w),
        bn_w=jnp.full((Ca,), 0.001, jnp.float32),
        bn_b=jnp.zeros((Ca,), jnp.float32),
    )


if __name__ == "__main__":
    key = jax.random.PRNGKey(0)
    kf, ka, kp = jax.random.split(key, 3)

    B, Cg, Ca, H, W = 2, 4, 4, 16, 16
    f = jax.random.normal(kf, (B, Cg, H, W), jnp.float32)
    alpha = jax.random.normal(ka, (B, Ca, H, W), jnp.float32)
    params = init_params(kp, out_channels=Ca, guidance_channels=Cg)

    # attn_tile=32 -> L=64 splits into 2x2 q/k tiles, exercising the online softmax.
    fwd = jax.jit(functools.partial(guided_cxt_atten, attn_tile=32))
    out = fwd(f, alpha, params)
    out = jax.block_until_ready(out)

    assert out.shape == alpha.shape, out.shape
    assert bool(jnp.all(jnp.isfinite(out)))
    print("KERNEL_OK")
</pallas_src>

<mosaic_0001>
module attributes {stable_mosaic.version = 11 : i64} {
  func.func @_pw_conv_kernel(%arg0: i32, %arg1: memref<512x4xf32, #tpu.memory_space<vmem>>, %arg2: memref<4x2xf32, #tpu.memory_space<vmem>>, %arg3: memref<1x2xf32, #tpu.memory_space<vmem>>, %arg4: memref<512x2xf32, #tpu.memory_space<vmem>>) attributes {dimension_semantics = [#tpu.dimension_semantics<parallel>], iteration_bounds = array<i64: 1>, scalar_prefetch = 0 : i64, scratch_operands = 0 : i64, tpu.core_type = #tpu.core_type<tc>, window_params = [{transform_indices = @transform_0, window_bounds = array<i64: 512, 4>}, {pipeline_mode = #tpu.pipeline_mode<synchronous>, transform_indices = @transform_1, window_bounds = array<i64: 4, 2>}, {pipeline_mode = #tpu.pipeline_mode<synchronous>, transform_indices = @transform_2, window_bounds = array<i64: 1, 2>}, {transform_indices = @transform_3, window_bounds = array<i64: 512, 2>}]} {
    %c0 = arith.constant 0 : index
    %c0_0 = arith.constant 0 : index
    %0 = vector.load %arg1[%c0, %c0_0] : memref<512x4xf32, #tpu.memory_space<vmem>>, vector<512x4xf32>
    %c0_1 = arith.constant 0 : index
    %c0_2 = arith.constant 0 : index
    %1 = vector.load %arg2[%c0_1, %c0_2] : memref<4x2xf32, #tpu.memory_space<vmem>>, vector<4x2xf32>
    %cst = arith.constant dense<0.000000e+00> : vector<512x2xf32>
    %2 = tpu.matmul %0, %1, %cst {dimension_numbers = #tpu.dot_dimension_numbers<[1], [0], [0], [1], [0, 0, 1, 1], [], []>} : vector<512x4xf32>, vector<4x2xf32>, vector<512x2xf32> -> vector<512x2xf32>
    %c0_3 = arith.constant 0 : index
    %c0_4 = arith.constant 0 : index
    %3 = vector.load %arg3[%c0_3, %c0_4] : memref<1x2xf32, #tpu.memory_space<vmem>>, vector<1x2xf32>
    %4 = vector.broadcast %3 : vector<1x2xf32> to vector<512x2xf32>
    %5 = arith.addf %2, %4 : vector<512x2xf32>
    %c0_5 = arith.constant 0 : index
    %c0_6 = arith.constant 0 : index
    %6 = vector.load %arg4[%c0_5, %c0_6] : memref<512x2xf32, #tpu.memory_space<vmem>>, vector<512x2xf32>
    tpu.vector_store %arg4[%c0_5, %c0_6], %5 {strides = array<i32>} : memref<512x2xf32, #tpu.memory_space<vmem>>, vector<512x2xf32>,
    return
  }
  func.func @transform_0(%arg0: i32) -> (i32, i32) {
    %c0_i32 = arith.constant 0 : i32
    %c0_i32_0 = arith.constant 0 : i32
    return %arg0, %c0_i32 : i32, i32
  }
  func.func @transform_1(%arg0: i32) -> (i32, i32) {
    %c0_i32 = arith.constant 0 : i32
    %c0_i32_0 = arith.constant 0 : i32
    %c0_i32_1 = arith.constant 0 : i32
    return %c0_i32, %c0_i32_0 : i32, i32
  }
  func.func @transform_2(%arg0: i32) -> (i32, i32) {
    %c0_i32 = arith.constant 0 : i32
    %c0_i32_0 = arith.constant 0 : i32
    %c0_i32_1 = arith.constant 0 : i32
    return %c0_i32, %c0_i32_0 : i32, i32
  }
  func.func @transform_3(%arg0: i32) -> (i32, i32) {
    %c0_i32 = arith.constant 0 : i32
    %c0_i32_0 = arith.constant 0 : i32
    return %arg0, %c0_i32 : i32, i32
  }
}

module attributes {stable_mosaic.version = 11 : i64} {
  func.func @_attn_kernel(%arg0: i32, %arg1: i32, %arg2: i32, %arg3: memref<1x32x128xf32, #tpu.memory_space<vmem>>, %arg4: memref<1x32x128xf32, #tpu.memory_space<vmem>>, %arg5: memref<1x32x128xbf16, #tpu.memory_space<vmem>>, %arg6: memref<1x32x128xf32, #tpu.memory_space<vmem>>, %arg7: memref<32x1xf32, #tpu.memory_space<vmem>>, %arg8: memref<32x1xf32, #tpu.memory_space<vmem>>) attributes {dimension_semantics = [#tpu.dimension_semantics<parallel>, #tpu.dimension_semantics<parallel>, #tpu.dimension_semantics<arbitrary>], iteration_bounds = array<i64: 2, 2, 2>, scalar_prefetch = 0 : i64, scratch_operands = 2 : i64, tpu.core_type = #tpu.core_type<tc>, window_params = [{transform_indices = @transform_0, window_bounds = array<i64: 1, 32, 128>}, {transform_indices = @transform_1, window_bounds = array<i64: 1, 32, 128>}, {transform_indices = @transform_2, window_bounds = array<i64: 1, 32, 128>}, {transform_indices = @transform_3, window_bounds = array<i64: 1, 32, 128>}]} {
    %c0_i32 = arith.constant 0 : i32
    %0 = arith.cmpi eq, %arg2, %c0_i32 : i32
    %1 = arith.extui %0 : i1 to i32
    %c0_i32_0 = arith.constant 0 : i32
    %2 = arith.cmpi ne, %1, %c0_i32_0 : i32
    scf.if %2 {
      %cst_32 = arith.constant 0xFF800000 : f32
      %60 = vector.broadcast %cst_32 : f32 to vector<32x1xf32>
      %c0_33 = arith.constant 0 : index
      %c0_34 = arith.constant 0 : index
      %61 = vector.load %arg7[%c0_33, %c0_34] : memref<32x1xf32, #tpu.memory_space<vmem>>, vector<32x1xf32>
      tpu.vector_store %arg7[%c0_33, %c0_34], %60 {strides = array<i32>} : memref<32x1xf32, #tpu.memory_space<vmem>>, vector<32x1xf32>,
      %cst_35 = arith.constant 0.000000e+00 : f32
      %62 = vector.broadcast %cst_35 : f32 to vector<32x1xf32>
      %c0_36 = arith.constant 0 : index
      %c0_37 = arith.constant 0 : index
      %63 = vector.load %arg8[%c0_36, %c0_37] : memref<32x1xf32, #tpu.memory_space<vmem>>, vector<32x1xf32>
      tpu.vector_store %arg8[%c0_36, %c0_37], %62 {strides = array<i32>} : memref<32x1xf32, #tpu.memory_space<vmem>>, vector<32x1xf32>,
      %cst_38 = arith.constant 0.000000e+00 : f32
      %64 = vector.broadcast %cst_38 : f32 to vector<1x32x128xf32>
      %c0_39 = arith.constant 0 : index
      %c0_40 = arith.constant 0 : index
      %c0_41 = arith.constant 0 : index
      %65 = vector.load %arg6[%c0_39, %c0_40, %c0_41] : memref<1x32x128xf32, #tpu.memory_space<vmem>>, vector<1x32x128xf32>
      tpu.vector_store %arg6[%c0_39, %c0_40, %c0_41], %64 {strides = array<i32>} : memref<1x32x128xf32, #tpu.memory_space<vmem>>, vector<1x32x128xf32>,
    } else {
    }
    %c0 = arith.constant 0 : index
    %c0_1 = arith.constant 0 : index
    %c0_2 = arith.constant 0 : index
    %3 = vector.load %arg3[%c0, %c0_1, %c0_2] : memref<1x32x128xf32, #tpu.memory_space<vmem>>, vector<1x32x128xf32>
    %4 = vector.shape_cast %3 : vector<1x32x128xf32> to vector<32x128xf32>
    %c0_3 = arith.constant 0 : index
    %c0_4 = arith.constant 0 : index
    %c0_5 = arith.constant 0 : index
    %5 = vector.load %arg4[%c0_3, %c0_4, %c0_5] : memref<1x32x128xf32, #tpu.memory_space<vmem>>, vector<1x32x128xf32>
    %6 = vector.shape_cast %5 : vector<1x32x128xf32> to vector<32x128xf32>
    %7 = arith.mulf %6, %6 : vector<32x128xf32>
    %cst = arith.constant dense<0.000000e+00> : vector<32xf32>
    %8 = vector.multi_reduction <add>, %7, %cst [1] : vector<32x128xf32> to vector<32xf32>
    %9 = vector.shape_cast %8 : vector<32xf32> to vector<32x1xf32>
    %cst_6 = arith.constant 9.99999993E-9 : f32
    %10 = vector.broadcast %cst_6 : f32 to vector<32x1xf32>
    %11 = arith.cmpf ogt, %9, %10 : vector<32x1xf32>
    %12 = math.rsqrt %9 : vector<32x1xf32>
    %cst_7 = arith.constant 1.000000e+04 : f32
    %13 = vector.broadcast %cst_7 : f32 to vector<32x1xf32>
    %14 = arith.select %11, %12, %13 : vector<32x1xi1>, vector<32x1xf32>
    %cst_8 = arith.constant 1.000000e+00 : f32
    %15 = vector.broadcast %cst_8 : f32 to vector<32x1xf32>
    %16 = arith.mulf %14, %15 : vector<32x1xf32>
    %17 = vector.broadcast %16 : vector<32x1xf32> to vector<32x128xf32>
    %18 = arith.mulf %6, %17 : vector<32x128xf32>
    %cst_9 = arith.constant dense<0.000000e+00> : vector<32x32xf32>
    %19 = tpu.matmul %4, %18, %cst_9 {dimension_numbers = #tpu.dot_dimension_numbers<[1], [1], [0], [0], [0, 0, 1, 0], [], []>} : vector<32x128xf32>, vector<32x128xf32>, vector<32x32xf32> -> vector<32x32xf32>
    %20 = tpu.iota {dimensions = array<i32: 0>} : vector<32x32xi32>
    %21 = tpu.iota {dimensions = array<i32: 1>} : vector<32x32xi32>
    %22 = arith.cmpi eq, %arg1, %arg2 : i32
    %23 = arith.cmpi eq, %20, %21 : vector<32x32xi32>
    %24 = vector.broadcast %22 : i1 to vector<32x32xi1>
    %25 = arith.andi %24, %23 : vector<32x32xi1>
    %cst_10 = arith.constant 1.000000e+04 : f32
    %26 = vector.broadcast %cst_10 : f32 to vector<32x32xf32>
    %27 = arith.subf %19, %26 : vector<32x32xf32>
    %28 = arith.select %25, %27, %19 : vector<32x32xi1>, vector<32x32xf32>
    %c0_11 = arith.constant 0 : index
    %c0_12 = arith.constant 0 : index
    %29 = vector.load %arg7[%c0_11, %c0_12] : memref<32x1xf32, #tpu.memory_space<vmem>>, vector<32x1xf32>
    %cst_13 = arith.constant dense<0xFF800000> : vector<32xf32>
    %30 = vector.multi_reduction <maximumf>, %28, %cst_13 [1] : vector<32x32xf32> to vector<32xf32>
    %31 = vector.shape_cast %30 : vector<32xf32> to vector<32x1xf32>
    %32 = arith.maximumf %29, %31 : vector<32x1xf32>
    %33 = arith.subf %29, %32 : vector<32x1xf32>
    %34 = math.exp %33 : vector<32x1xf32>
    %35 = vector.broadcast %32 : vector<32x1xf32> to vector<32x32xf32>
    %36 = arith.subf %28, %35 : vector<32x32xf32>
    %37 = math.exp %36 : vector<32x32xf32>
    %c0_14 = arith.constant 0 : index
    %c0_15 = arith.constant 0 : index
    %38 = vector.load %arg8[%c0_14, %c0_15] : memref<32x1xf32, #tpu.memory_space<vmem>>, vector<32x1xf32>
    %39 = arith.mulf %34, %38 : vector<32x1xf32>
    %cst_16 = arith.constant dense<0.000000e+00> : vector<32xf32>
    %40 = vector.multi_reduction <add>, %37, %cst_16 [1] : vector<32x32xf32> to vector<32xf32>
    %41 = vector.shape_cast %40 : vector<32xf32> to vector<32x1xf32>
    %42 = arith.addf %39, %41 : vector<32x1xf32>
    %c0_17 = arith.constant 0 : index
    %c0_18 = arith.constant 0 : index
    %43 = vector.load %arg8[%c0_17, %c0_18] : memref<32x1xf32, #tpu.memory_space<vmem>>, vector<32x1xf32>
    tpu.vector_store %arg8[%c0_17, %c0_18], %42 {strides = array<i32>} : memref<32x1xf32, #tpu.memory_space<vmem>>, vector<32x1xf32>,
    %c0_19 = arith.constant 0 : index
    %c0_20 = arith.constant 0 : index
    %c0_21 = arith.constant 0 : index
    %44 = vector.load %arg6[%c0_19, %c0_20, %c0_21] : memref<1x32x128xf32, #tpu.memory_space<vmem>>, vector<1x32x128xf32>
    %45 = vector.shape_cast %44 : vector<1x32x128xf32> to vector<32x128xf32>
    %46 = vector.broadcast %34 : vector<32x1xf32> to vector<32x128xf32>
    %47 = arith.mulf %46, %45 : vector<32x128xf32>
    %48 = arith.truncf %37 : vector<32x32xf32> to vector<32x32xbf16>
    %c0_22 = arith.constant 0 : index
    %c0_23 = arith.constant 0 : index
    %c0_24 = arith.constant 0 : index
    %49 = vector.load %arg5[%c0_22, %c0_23, %c0_24] : memref<1x32x128xbf16, #tpu.memory_space<vmem>>, vector<1x32x128xbf16>
    %50 = vector.shape_cast %49 : vector<1x32x128xbf16> to vector<32x128xbf16>
    %cst_25 = arith.constant dense<0.000000e+00> : vector<32x128xf32>
    %51 = tpu.matmul %48, %50, %cst_25 {dimension_numbers = #tpu.dot_dimension_numbers<[1], [0], [0], [1], [0, 0, 1, 1], [], []>} : vector<32x32xbf16>, vector<32x128xbf16>, vector<32x128xf32> -> vector<32x128xf32>
    %52 = arith.addf %47, %51 : vector<32x128xf32>
    %c0_26 = arith.constant 0 : index
    %c0_27 = arith.constant 0 : index
    %c0_28 = arith.constant 0 : index
    %53 = vector.load %arg6[%c0_26, %c0_27, %c0_28] : memref<1x32x128xf32, #tpu.memory_space<vmem>>, vector<1x32x128xf32>
    %54 = vector.shape_cast %53 : vector<1x32x128xf32> to vector<32x128xf32>
    %55 = vector.shape_cast %52 : vector<32x128xf32> to vector<1x32x128xf32>
    tpu.vector_store %arg6[%c0_26, %c0_27, %c0_28], %55 {strides = array<i32>} : memref<1x32x128xf32, #tpu.memory_space<vmem>>, vector<1x32x128xf32>,
    %c0_29 = arith.constant 0 : index
    %c0_30 = arith.constant 0 : index
    %56 = vector.load %arg7[%c0_29, %c0_30] : memref<32x1xf32, #tpu.memory_space<vmem>>, vector<32x1xf32>
    tpu.vector_store %arg7[%c0_29, %c0_30], %32 {strides = array<i32>} : memref<32x1xf32, #tpu.memory_space<vmem>>, vector<32x1xf32>,
    %c1_i32 = arith.constant 1 : i32
    %57 = arith.cmpi eq, %arg2, %c1_i32 : i32
    %58 = arith.extui %57 : i1 to i32
    %c0_i32_31 = arith.constant 0 : i32
    %59 = arith.cmpi ne, %58, %c0_i32_31 : i32
    scf.if %59 {
      %c0_32 = arith.constant 0 : index
      %c0_33 = arith.constant 0 : index
      %c0_34 = arith.constant 0 : index
      %60 = vector.load %arg6[%c0_32, %c0_33, %c0_34] : memref<1x32x128xf32, #tpu.memory_space<vmem>>, vector<1x32x128xf32>
      %61 = vector.shape_cast %60 : vector<1x32x128xf32> to vector<32x128xf32>
      %c0_35 = arith.constant 0 : index
      %c0_36 = arith.constant 0 : index
      %62 = vector.load %arg8[%c0_35, %c0_36] : memref<32x1xf32, #tpu.memory_space<vmem>>, vector<32x1xf32>
      %63 = tpu.reciprocal %62 {approx = true} : vector<32x1xf32> -> vector<32x1xf32>
      %cst_37 = arith.constant 2.500000e-01 : f32
      %64 = vector.broadcast %cst_37 : f32 to vector<32x1xf32>
      %65 = arith.mulf %63, %64 : vector<32x1xf32>
      %66 = vector.broadcast %65 : vector<32x1xf32> to vector<32x128xf32>
      %67 = arith.mulf %61, %66 : vector<32x128xf32>
      %c0_38 = arith.constant 0 : index
      %c0_39 = arith.constant 0 : index
      %c0_40 = arith.constant 0 : index
      %68 = vector.load %arg6[%c0_38, %c0_39, %c0_40] : memref<1x32x128xf32, #tpu.memory_space<vmem>>, vector<1x32x128xf32>
      %69 = vector.shape_cast %68 : vector<1x32x128xf32> to vector<32x128xf32>
      %70 = vector.shape_cast %67 : vector<32x128xf32> to vector<1x32x128xf32>
      tpu.vector_store %arg6[%c0_38, %c0_39, %c0_40], %70 {strides = array<i32>} : memref<1x32x128xf32, #tpu.memory_space<vmem>>, vector<1x32x128xf32>,
    } else {
    }
    return
  }
  func.func @transform_0(%arg0: i32, %arg1: i32, %arg2: i32) -> (i32, i32, i32) {
    %c0_i32 = arith.constant 0 : i32
    %c0_i32_0 = arith.constant 0 : i32
    return %arg0, %arg1, %c0_i32 : i32, i32, i32
  }
  func.func @transform_1(%arg0: i32, %arg1: i32, %arg2: i32) -> (i32, i32, i32) {
    %c0_i32 = arith.constant 0 : i32
    %c0_i32_0 = arith.constant 0 : i32
    return %arg0, %arg2, %c0_i32 : i32, i32, i32
  }
  func.func @transform_2(%arg0: i32, %arg1: i32, %arg2: i32) -> (i32, i32, i32) {
    %c0_i32 = arith.constant 0 : i32
    %c0_i32_0 = arith.constant 0 : i32
    return %arg0, %arg2, %c0_i32 : i32, i32, i32
  }
  func.func @transform_3(%arg0: i32, %arg1: i32, %arg2: i32) -> (i32, i32, i32) {
    %c0_i32 = arith.constant 0 : i32
    %c0_i32_0 = arith.constant 0 : i32
    return %arg0, %arg1, %c0_i32 : i32, i32, i32
  }
}

module attributes {stable_mosaic.version = 11 : i64} {
  func.func @_pw_conv_kernel(%arg0: i32, %arg1: memref<512x4xf32, #tpu.memory_space<vmem>>, %arg2: memref<4x4xf32, #tpu.memory_space<vmem>>, %arg3: memref<1x4xf32, #tpu.memory_space<vmem>>, %arg4: memref<512x4xf32, #tpu.memory_space<vmem>>) attributes {dimension_semantics = [#tpu.dimension_semantics<parallel>], iteration_bounds = array<i64: 1>, scalar_prefetch = 0 : i64, scratch_operands = 0 : i64, tpu.core_type = #tpu.core_type<tc>, window_params = [{transform_indices = @transform_0, window_bounds = array<i64: 512, 4>}, {pipeline_mode = #tpu.pipeline_mode<synchronous>, transform_indices = @transform_1, window_bounds = array<i64: 4, 4>}, {pipeline_mode = #tpu.pipeline_mode<synchronous>, transform_indices = @transform_2, window_bounds = array<i64: 1, 4>}, {transform_indices = @transform_3, window_bounds = array<i64: 512, 4>}]} {
    %c0 = arith.constant 0 : index
    %c0_0 = arith.constant 0 : index
    %0 = vector.load %arg1[%c0, %c0_0] : memref<512x4xf32, #tpu.memory_space<vmem>>, vector<512x4xf32>
    %c0_1 = arith.constant 0 : index
    %c0_2 = arith.constant 0 : index
    %1 = vector.load %arg2[%c0_1, %c0_2] : memref<4x4xf32, #tpu.memory_space<vmem>>, vector<4x4xf32>
    %cst = arith.constant dense<0.000000e+00> : vector<512x4xf32>
    %2 = tpu.matmul %0, %1, %cst {dimension_numbers = #tpu.dot_dimension_numbers<[1], [0], [0], [1], [0, 0, 1, 1], [], []>} : vector<512x4xf32>, vector<4x4xf32>, vector<512x4xf32> -> vector<512x4xf32>
    %c0_3 = arith.constant 0 : index
    %c0_4 = arith.constant 0 : index
    %3 = vector.load %arg3[%c0_3, %c0_4] : memref<1x4xf32, #tpu.memory_space<vmem>>, vector<1x4xf32>
    %4 = vector.broadcast %3 : vector<1x4xf32> to vector<512x4xf32>
    %5 = arith.addf %2, %4 : vector<512x4xf32>
    %c0_5 = arith.constant 0 : index
    %c0_6 = arith.constant 0 : index
    %6 = vector.load %arg4[%c0_5, %c0_6] : memref<512x4xf32, #tpu.memory_space<vmem>>, vector<512x4xf32>
    tpu.vector_store %arg4[%c0_5, %c0_6], %5 {strides = array<i32>} : memref<512x4xf32, #tpu.memory_space<vmem>>, vector<512x4xf32>,
    return
  }
  func.func @transform_0(%arg0: i32) -> (i32, i32) {
    %c0_i32 = arith.constant 0 : i32
    %c0_i32_0 = arith.constant 0 : i32
    return %arg0, %c0_i32 : i32, i32
  }
  func.func @transform_1(%arg0: i32) -> (i32, i32) {
    %c0_i32 = arith.constant 0 : i32
    %c0_i32_0 = arith.constant 0 : i32
    %c0_i32_1 = arith.constant 0 : i32
    return %c0_i32, %c0_i32_0 : i32, i32
  }
  func.func @transform_2(%arg0: i32) -> (i32, i32) {
    %c0_i32 = arith.constant 0 : i32
    %c0_i32_0 = arith.constant 0 : i32
    %c0_i32_1 = arith.constant 0 : i32
    return %c0_i32, %c0_i32_0 : i32, i32
  }
  func.func @transform_3(%arg0: i32) -> (i32, i32) {
    %c0_i32 = arith.constant 0 : i32
    %c0_i32_0 = arith.constant 0 : i32
    return %arg0, %c0_i32 : i32, i32
  }
}

</mosaic_0001>

<llo_original>
// kernel: guided_cxt_atten.3
$region0: #{guided_cxt_atten.3}
  #allocation0 [shape = 'u32[]', space=smem, size = 0x4, offset = 0x4, fixed_abs, tag = 'smem constant byte address 0x4 - core index']
  #allocation1 [shape = 'u32[144,128]{1,0:T(1,128)}', space=vmem, size = 0x12000, scoped, tag = 'internal scratch']
  %s0 = inlined_call_operand.vmem [shape: f32[512,4], index: 0, kind: input, shape index: {}]
  %s1 = inlined_call_operand.vmem [shape: f32[4,2], index: 1, kind: input, shape index: {}]
  %s2 = inlined_call_operand.vmem [shape: f32[1,2], index: 2, kind: input, shape index: {}]
  %s3 = inlined_call_operand.vmem [shape: f32[512,2], index: 3, kind: output, shape index: {}]
  %s4 = sld [smem:[#allocation0]]
  $region22: #{guided_cxt_atten.3} parent=0
    _
  %s6 = ssub.s32 1, %s4
  %s7 = scalar_select 0, %s6, %s4
  // Predicated region
  $region2: #{guided_cxt_atten.3} parent=0 // pred_check
    _
  $region3: #{guided_cxt_atten.3} parent=0 // pred_check_branch
    %9 = sbr.rel (0) target = $region5
  $region4: #{guided_cxt_atten.3} parent=0 // pred_region
    _
  $region5: #{guided_cxt_atten.3} parent=0 // pred_fallthru
    _
  // Predicated region
  $region6: #{guided_cxt_atten.3} parent=0 // pred_check
    _
  $region7: #{guided_cxt_atten.3} parent=0 // pred_check_branch
    %11 = sbr.rel (0) target = $region9
  $region8: #{guided_cxt_atten.3} parent=0 // pred_region
    _
  $region9: #{guided_cxt_atten.3} parent=0 // pred_fallthru
    _
  // Predicated region
  $region10: #{guided_cxt_atten.3} parent=0 // pred_check
    _
  $region11: #{guided_cxt_atten.3} parent=0 // pred_check_branch
    %13 = sbr.rel (0) target = $region13
  $region12: #{guided_cxt_atten.3} parent=0 // pred_region
    _
  $region13: #{guided_cxt_atten.3} parent=0 // pred_fallthru
    _
  %v14 = vld [vmem:[%s0] sm:$0xff]
  %v15 = vld [vmem:[%s0 + $0x8] sm:$0xff]
  %v16 = vld [vmem:[%s0 + $0x10] sm:$0xff]
  %v17 = vld [vmem:[%s0 + $0x18] sm:$0xff]
  %v18 = vld [vmem:[%s0 + $0x20] sm:$0xff]
  %v19 = vld [vmem:[%s0 + $0x28] sm:$0xff]
  %v20 = vld [vmem:[%s0 + $0x30] sm:$0xff]
  %v21 = vld [vmem:[%s0 + $0x38] sm:$0xff]
  %v22 = vld [vmem:[%s0 + $0x40] sm:$0xff]
  %v23 = vld [vmem:[%s0 + $0x48] sm:$0xff]
  %v24 = vld [vmem:[%s0 + $0x50] sm:$0xff]
  %v25 = vld [vmem:[%s0 + $0x58] sm:$0xff]
  %v26 = vld [vmem:[%s0 + $0x60] sm:$0xff]
  %v27 = vld [vmem:[%s0 + $0x68] sm:$0xff]
  %v28 = vld [vmem:[%s0 + $0x70] sm:$0xff]
  %v29 = vld [vmem:[%s0 + $0x78] sm:$0xff]
  %v30 = vld [vmem:[%s0 + $0x80] sm:$0xff]
  %v31 = vld [vmem:[%s0 + $0x88] sm:$0xff]
  %v32 = vld [vmem:[%s0 + $0x90] sm:$0xff]
  %v33 = vld [vmem:[%s0 + $0x98] sm:$0xff]
  %v34 = vld [vmem:[%s0 + $0xa0] sm:$0xff]
  %v35 = vld [vmem:[%s0 + $0xa8] sm:$0xff]
  %v36 = vld [vmem:[%s0 + $0xb0] sm:$0xff]
  %v37 = vld [vmem:[%s0 + $0xb8] sm:$0xff]
  %v38 = vld [vmem:[%s0 + $0xc0] sm:$0xff]
  %v39 = vld [vmem:[%s0 + $0xc8] sm:$0xff]
  %v40 = vld [vmem:[%s0 + $0xd0] sm:$0xff]
  %v41 = vld [vmem:[%s0 + $0xd8] sm:$0xff]
  %v42 = vld [vmem:[%s0 + $0xe0] sm:$0xff]
  %v43 = vld [vmem:[%s0 + $0xe8] sm:$0xff]
  %v44 = vld [vmem:[%s0 + $0xf0] sm:$0xff]
  %v45 = vld [vmem:[%s0 + $0xf8] sm:$0xff]
  %v46 = vld [vmem:[%s0 + $0x100] sm:$0xff]
  %v47 = vld [vmem:[%s0 + $0x108] sm:$0xff]
  %v48 = vld [vmem:[%s0 + $0x110] sm:$0xff]
  %v49 = vld [vmem:[%s0 + $0x118] sm:$0xff]
  %v50 = vld [vmem:[%s0 + $0x120] sm:$0xff]
  %v51 = vld [vmem:[%s0 + $0x128] sm:$0xff]
  %v52 = vld [vmem:[%s0 + $0x130] sm:$0xff]
  %v53 = vld [vmem:[%s0 + $0x138] sm:$0xff]
  %v54 = vld [vmem:[%s0 + $0x140] sm:$0xff]
  %v55 = vld [vmem:[%s0 + $0x148] sm:$0xff]
  %v56 = vld [vmem:[%s0 + $0x150] sm:$0xff]
  %v57 = vld [vmem:[%s0 + $0x158] sm:$0xff]
  %v58 = vld [vmem:[%s0 + $0x160] sm:$0xff]
  %v59 = vld [vmem:[%s0 + $0x168] sm:$0xff]
  %v60 = vld [vmem:[%s0 + $0x170] sm:$0xff]
  %v61 = vld [vmem:[%s0 + $0x178] sm:$0xff]
  %v62 = vld [vmem:[%s0 + $0x180] sm:$0xff]
  %v63 = vld [vmem:[%s0 + $0x188] sm:$0xff]
  %v64 = vld [vmem:[%s0 + $0x190] sm:$0xff]
  %v65 = vld [vmem:[%s0 + $0x198] sm:$0xff]
  %v66 = vld [vmem:[%s0 + $0x1a0] sm:$0xff]
  %v67 = vld [vmem:[%s0 + $0x1a8] sm:$0xff]
  %v68 = vld [vmem:[%s0 + $0x1b0] sm:$0xff]
  %v69 = vld [vmem:[%s0 + $0x1b8] sm:$0xff]
  %v70 = vld [vmem:[%s0 + $0x1c0] sm:$0xff]
  %v71 = vld [vmem:[%s0 + $0x1c8] sm:$0xff]
  %v72 = vld [vmem:[%s0 + $0x1d0] sm:$0xff]
  %v73 = vld [vmem:[%s0 + $0x1d8] sm:$0xff]
  %v74 = vld [vmem:[%s0 + $0x1e0] sm:$0xff]
  %v75 = vld [vmem:[%s0 + $0x1e8] sm:$0xff]
  %v76 = vld [vmem:[%s0 + $0x1f0] sm:$0xff]
  %v77 = vld [vmem:[%s0 + $0x1f8] sm:$0xff]
  %v78 = vld [vmem:[%s1] sm:$0xf]
  %v79 = vld [vmem:[%s2] sm:$0x1]
  %v81 = vlaneseq
  %v82 = vshrl.u32 %v81, 7
  %v83 = vsub.s32 0, %v82
  %v84 = vrot.slane %v79, %v83
  %vm86 = vcmask 31744
  %v88 = vsel %vm86, %v14, 0
  %v91 = vsel %vm86, %v15, 0
  %v94 = vsel %vm86, %v16, 0
  %v97 = vsel %vm86, %v17, 0
  %v100 = vsel %vm86, %v18, 0
  %v103 = vsel %vm86, %v19, 0
  %v106 = vsel %vm86, %v20, 0
  %v109 = vsel %vm86, %v21, 0
  %v112 = vsel %vm86, %v22, 0
  %v115 = vsel %vm86, %v23, 0
  %v118 = vsel %vm86, %v24, 0
  %v121 = vsel %vm86, %v25, 0
  %v124 = vsel %vm86, %v26, 0
  %v127 = vsel %vm86, %v27, 0
  %v130 = vsel %vm86, %v28, 0
  %v133 = vsel %vm86, %v29, 0
  %v136 = vsel %vm86, %v30, 0
  %v139 = vsel %vm86, %v31, 0
  %v142 = vsel %vm86, %v32, 0
  %v145 = vsel %vm86, %v33, 0
  %v148 = vsel %vm86, %v34, 0
  %v151 = vsel %vm86, %v35, 0
  %v154 = vsel %vm86, %v36, 0
  %v157 = vsel %vm86, %v37, 0
  %v160 = vsel %vm86, %v38, 0
  %v163 = vsel %vm86, %v39, 0
  %v166 = vsel %vm86, %v40, 0
  %v169 = vsel %vm86, %v41, 0
  %v172 = vsel %vm86, %v42, 0
  %v175 = vsel %vm86, %v43, 0
  %v178 = vsel %vm86, %v44, 0
  %v181 = vsel %vm86, %v45, 0
  %v184 = vsel %vm86, %v46, 0
  %v187 = vsel %vm86, %v47, 0
  %v190 = vsel %vm86, %v48, 0
  %v193 = vsel %vm86, %v49, 0
  %v196 = vsel %vm86, %v50, 0
  %v199 = vsel %vm86, %v51, 0
  %v202 = vsel %vm86, %v52, 0
  %v205 = vsel %vm86, %v53, 0
  %v208 = vsel %vm86, %v54, 0
  %v211 = vsel %vm86, %v55, 0
  %v214 = vsel %vm86, %v56, 0
  %v217 = vsel %vm86, %v57, 0
  %v220 = vsel %vm86, %v58, 0
  %v223 = vsel %vm86, %v59, 0
  %v226 = vsel %vm86, %v60, 0
  %v229 = vsel %vm86, %v61, 0
  %v232 = vsel %vm86, %v62, 0
  %v235 = vsel %vm86, %v63, 0
  %v238 = vsel %vm86, %v64, 0
  %v241 = vsel %vm86, %v65, 0
  %v244 = vsel %vm86, %v66, 0
  %v247 = vsel %vm86, %v67, 0
  %v250 = vsel %vm86, %v68, 0
  %v253 = vsel %vm86, %v69, 0
  %v256 = vsel %vm86, %v70, 0
  %v259 = vsel %vm86, %v71, 0
  %v262 = vsel %vm86, %v72, 0
  %v265 = vsel %vm86, %v73, 0
  %v268 = vsel %vm86, %v74, 0
  %v271 = vsel %vm86, %v75, 0
  %v274 = vsel %vm86, %v76, 0
  %v277 = vsel %vm86, %v77, 0
  %vm279 = vcmask 1043456
  %v281 = vsel %vm279, %v78, 0
  %283 = vmatprep.subr.mxu0 0.0
  %284 = vmatpush1.msra.mxu0 %v281
  %285 = vmatprep.subr.mxu0 0.0
  %286 = vmatpush1.msra.mxu0 0.0
  %287 = vmatprep.subr.mxu0 0.0
  %288 = vmatpush1.msra.mxu0 0.0
  %289 = vmatprep.subr.mxu0 0.0
  %290 = vmatpush1.msra.mxu0 0.0
  %291 = vmatprep.subr.mxu0 0.0
  %292 = vmatpush1.msra.mxu0 0.0
  %293 = vmatprep.subr.mxu0 0.0
  %294 = vmatpush1.msra.mxu0 0.0
  %295 = vmatprep.subr.mxu0 0.0
  %296 = vmatpush1.msra.mxu0 0.0
  %297 = vmatprep.subr.mxu0 0.0
  %298 = vmatpush1.msra.mxu0 0.0
  %299 = vmatprep.subr.mxu0 0.0
  %300 = vmatpush1.msra.mxu0 0.0
  %301 = vmatprep.subr.mxu0 0.0
  %302 = vmatpush1.msra.mxu0 0.0
  %303 = vmatprep.subr.mxu0 0.0
  %304 = vmatpush1.msra.mxu0 0.0
  %305 = vmatprep.subr.mxu0 0.0
  %306 = vmatpush1.msra.mxu0 0.0
  %307 = vmatprep.subr.mxu0 0.0
  %308 = vmatpush1.msra.mxu0 0.0
  %309 = vmatprep.subr.mxu0 0.0
  %310 = vmatpush1.msra.mxu0 0.0
  %311 = vmatprep.subr.mxu0 0.0
  %312 = vmatpush1.msra.mxu0 0.0
  %313 = vmatprep.subr.mxu0 0.0
  %314 = vmatpush1.msra.mxu0 0.0
  %315 = vmatprep.subr.mxu0 0.0
  %316 = vmatpush1.msra.mxu0 0.0
  %317 = vmatprep.subr.mxu0 0.0
  %318 = vmatpush1.msra.mxu0 0.0
  %319 = vmatprep.subr.mxu0 0.0
  %320 = vmatpush1.msra.mxu0 0.0
  %321 = vmatprep.subr.mxu0 0.0
  %322 = vmatpush1.msra.mxu0 0.0
  %323 = vmatprep.subr.mxu0 0.0
  %324 = vmatpush1.msra.mxu0 0.0
  %325 = vmatprep.subr.mxu0 0.0
  %326 = vmatpush1.msra.mxu0 0.0
  %327 = vmatprep.subr.mxu0 0.0
  %328 = vmatpush1.msra.mxu0 0.0
  %329 = vmatprep.subr.mxu0 0.0
  %330 = vmatpush1.msra.mxu0 0.0
  %331 = vmatprep.subr.mxu0 0.0
  %332 = vmatpush1.msra.mxu0 0.0
  %333 = vmatprep.subr.mxu0 0.0
  %334 = vmatpush1.msra.mxu0 0.0
  %335 = vmatprep.subr.mxu0 0.0
  %336 = vmatpush1.msra.mxu0 0.0
  %337 = vmatprep.subr.mxu0 0.0
  %338 = vmatpush1.msra.mxu0 0.0
  %339 = vmatprep.subr.mxu0 0.0
  %340 = vmatpush1.msra.mxu0 0.0
  %341 = vmatprep.subr.mxu0 0.0
  %342 = vmatpush1.msra.mxu0 0.0
  %343 = vmatprep.subr.mxu0 0.0
  %344 = vmatpush1.msra.mxu0 0.0
  %345 = vmatprep.subr.mxu0 0.0
  %346 = vmatpush1.msra.mxu0 0.0
  %347 = vmatprep.mubr.f32.mxu0 0.0
  %348 = vmatmul.mubr.f32.gmra.mrb[0].mxu0 %v88
  %v349 = vpop.f32.mrb[0].mxu0
  %v350 = vadd.f32 %v84, %v349
  %v351 = vpop.f32.mrb[0].mxu0
  %352 = vmatprep.mubr.f32.mxu0 0.0
  %353 = vmatmul.mubr.f32.gmra.mrb[0].mxu0 %v91
  %v354 = vpop.f32.mrb[0].mxu0
  %v355 = vadd.f32 %v84, %v354
  %v356 = vpop.f32.mrb[0].mxu0
  %357 = vmatprep.mubr.f32.mxu0 0.0
  %358 = vmatmul.mubr.f32.gmra.mrb[0].mxu0 %v94
  %v359 = vpop.f32.mrb[0].mxu0
  %v360 = vadd.f32 %v84, %v359
  %v361 = vpop.f32.mrb[0].mxu0
  %362 = vmatprep.mubr.f32.mxu0 0.0
  %363 = vmatmul.mubr.f32.gmra.mrb[0].mxu0 %v97
  %v364 = vpop.f32.mrb[0].mxu0
  %v365 = vadd.f32 %v84, %v364
  %v366 = vpop.f32.mrb[0].mxu0
  %367 = vmatprep.mubr.f32.mxu0 0.0
  %368 = vmatmul.mubr.f32.gmra.mrb[0].mxu0 %v100
  %v369 = vpop.f32.mrb[0].mxu0
  %v370 = vadd.f32 %v84, %v369
  %v371 = vpop.f32.mrb[0].mxu0
  %372 = vmatprep.mubr.f32.mxu0 0.0
  %373 = vmatmul.mubr.f32.gmra.mrb[0].mxu0 %v103
  %v374 = vpop.f32.mrb[0].mxu0
  %v375 = vadd.f32 %v84, %v374
  %v376 = vpop.f32.mrb[0].mxu0
  %377 = vmatprep.mubr.f32.mxu0 0.0
  %378 = vmatmul.mubr.f32.gmra.mrb[0].mxu0 %v106
  %v379 = vpop.f32.mrb[0].mxu0
  %v380 = vadd.f32 %v84, %v379
  %v381 = vpop.f32.mrb[0].mxu0
  %382 = vmatprep.mubr.f32.mxu0 0.0
  %383 = vmatmul.mubr.f32.gmra.mrb[0].mxu0 %v109
  %v384 = vpop.f32.mrb[0].mxu0
  %v385 = vadd.f32 %v84, %v384
  %v386 = vpop.f32.mrb[0].mxu0
  %387 = vmatprep.mubr.f32.mxu0 0.0
  %388 = vmatmul.mubr.f32.gmra.mrb[0].mxu0 %v112
  %v389 = vpop.f32.mrb[0].mxu0
  %v390 = vadd.f32 %v84, %v389
  %v391 = vpop.f32.mrb[0].mxu0
  %392 = vmatprep.mubr.f32.mxu0 0.0
  %393 = vmatmul.mubr.f32.gmra.mrb[0].mxu0 %v115
  %v394 = vpop.f32.mrb[0].mxu0
  %v395 = vadd.f32 %v84, %v394
  %v396 = vpop.f32.mrb[0].mxu0
  %397 = vmatprep.mubr.f32.mxu0 0.0
  %398 = vmatmul.mubr.f32.gmra.mrb[0].mxu0 %v118
  %v399 = vpop.f32.mrb[0].mxu0
  %v400 = vadd.f32 %v84, %v399
  %v401 = vpop.f32.mrb[0].mxu0
  %402 = vmatprep.mubr.f32.mxu0 0.0
  %403 = vmatmul.mubr.f32.gmra.mrb[0].mxu0 %v121
  %v404 = vpop.f32.mrb[0].mxu0
  %v405 = vadd.f32 %v84, %v404
  %v406 = vpop.f32.mrb[0].mxu0
  %407 = vmatprep.mubr.f32.mxu0 0.0
  %408 = vmatmul.mubr.f32.gmra.mrb[0].mxu0 %v124
  %v409 = vpop.f32.mrb[0].mxu0
  %v410 = vadd.f32 %v84, %v409
  %v411 = vpop.f32.mrb[0].mxu0
  %412 = vmatprep.mubr.f32.mxu0 0.0
  %413 = vmatmul.mubr.f32.gmra.mrb[0].mxu0 %v127
  %v414 = vpop.f32.mrb[0].mxu0
  %v415 = vadd.f32 %v84, %v414
  %v416 = vpop.f32.mrb[0].mxu0
  %417 = vmatprep.mubr.f32.mxu0 0.0
  %418 = vmatmul.mubr.f32.gmra.mrb[0].mxu0 %v130
  %v419 = vpop.f32.mrb[0].mxu0
  %v420 = vadd.f32 %v84, %v419
  %v421 = vpop.f32.mrb[0].mxu0
  %422 = vmatprep.mubr.f32.mxu0 0.0
  %423 = vmatmul.mubr.f32.gmra.mrb[0].mxu0 %v133
  %v424 = vpop.f32.mrb[0].mxu0
  %v425 = vadd.f32 %v84, %v424
  %v426 = vpop.f32.mrb[0].mxu0
  %427 = vmatprep.mubr.f32.mxu0 0.0
  %428 = vmatmul.mubr.f32.gmra.mrb[0].mxu0 %v136
  %v429 = vpop.f32.mrb[0].mxu0
  %v430 = vadd.f32 %v84, %v429
  %v431 = vpop.f32.mrb[0].mxu0
  %432 = vmatprep.mubr.f32.mxu0 0.0
  %433 = vmatmul.mubr.f32.gmra.mrb[0].mxu0 %v139
  %v434 = vpop.f32.mrb[0].mxu0
  %v435 = vadd.f32 %v84, %v434
  %v436 = vpop.f32.mrb[0].mxu0
  %437 = vmatprep.mubr.f32.mxu0 0.0
  %438 = vmatmul.mubr.f32.gmra.mrb[0].mxu0 %v142
  %v439 = vpop.f32.mrb[0].mxu0
  %v440 = vadd.f32 %v84, %v439
  %v441 = vpop.f32.mrb[0].mxu0
  %442 = vmatprep.mubr.f32.mxu0 0.0
  %443 = vmatmul.mubr.f32.gmra.mrb[0].mxu0 %v145
  %v444 = vpop.f32.mrb[0].mxu0
  %v445 = vadd.f32 %v84, %v444
  %v446 = vpop.f32.mrb[0].mxu0
  %447 = vmatprep.mubr.f32.mxu0 0.0
  %448 = vmatmul.mubr.f32.gmra.mrb[0].mxu0 %v148
  %v449 = vpop.f32.mrb[0].mxu0
  %v450 = vadd.f32 %v84, %v449
  %v451 = vpop.f32.mrb[0].mxu0
  %452 = vmatprep.mubr.f32.mxu0 0.0
  %453 = vmatmul.mubr.f32.gmra.mrb[0].mxu0 %v151
  %v454 = vpop.f32.mrb[0].mxu0
  %v455 = vadd.f32 %v84, %v454
  %v456 = vpop.f32.mrb[0].mxu0
  %457 = vmatprep.mubr.f32.mxu0 0.0
  %458 = vmatmul.mubr.f32.gmra.mrb[0].mxu0 %v154
  %v459 = vpop.f32.mrb[0].mxu0
  %v460 = vadd.f32 %v84, %v459
  %v461 = vpop.f32.mrb[0].mxu0
  %462 = vmatprep.mubr.f32.mxu0 0.0
  %463 = vmatmul.mubr.f32.gmra.mrb[0].mxu0 %v157
  %v464 = vpop.f32.mrb[0].mxu0
  %v465 = vadd.f32 %v84, %v464
  %v466 = vpop.f32.mrb[0].mxu0
  %467 = vmatprep.mubr.f32.mxu0 0.0
  %468 = vmatmul.mubr.f32.gmra.mrb[0].mxu0 %v160
  %v469 = vpop.f32.mrb[0].mxu0
  %v470 = vadd.f32 %v84, %v469
  %v471 = vpop.f32.mrb[0].mxu0
  %472 = vmatprep.mubr.f32.mxu0 0.0
  %473 = vmatmul.mubr.f32.gmra.mrb[0].mxu0 %v163
  %v474 = vpop.f32.mrb[0].mxu0
  %v475 = vadd.f32 %v84, %v474
  %v476 = vpop.f32.mrb[0].mxu0
  %477 = vmatprep.mubr.f32.mxu0 0.0
  %478 = vmatmul.mubr.f32.gmra.mrb[0].mxu0 %v166
  %v479 = vpop.f32.mrb[0].mxu0
  %v480 = vadd.f32 %v84, %v479
  %v481 = vpop.f32.mrb[0].mxu0
  %482 = vmatprep.mubr.f32.mxu0 0.0
  %483 = vmatmul.mubr.f32.gmra.mrb[0].mxu0 %v169
  %v484 = vpop.f32.mrb[0].mxu0
  %v485 = vadd.f32 %v84, %v484
  %v486 = vpop.f32.mrb[0].mxu0
  %487 = vmatprep.mubr.f32.mxu0 0.0
  %488 = vmatmul.mubr.f32.gmra.mrb[0].mxu0 %v172
  %v489 = vpop.f32.mrb[0].mxu0
  %v490 = vadd.f32 %v84, %v489
  %v491 = vpop.f32.mrb[0].mxu0
  %492 = vmatprep.mubr.f32.mxu0 0.0
  %493 = vmatmul.mubr.f32.gmra.mrb[0].mxu0 %v175
  %v494 = vpop.f32.mrb[0].mxu0
  %v495 = vadd.f32 %v84, %v494
  %v496 = vpop.f32.mrb[0].mxu0
  %497 = vmatprep.mubr.f32.mxu0 0.0
  %498 = vmatmul.mubr.f32.gmra.mrb[0].mxu0 %v178
  %v499 = vpop.f32.mrb[0].mxu0
  %v500 = vadd.f32 %v84, %v499
  %v501 = vpop.f32.mrb[0].mxu0
  %502 = vmatprep.mubr.f32.mxu0 0.0
  %503 = vmatmul.mubr.f32.gmra.mrb[0].mxu0 %v181
  %v504 = vpop.f32.mrb[0].mxu0
  %v505 = vadd.f32 %v84, %v504
  %v506 = vpop.f32.mrb[0].mxu0
  %507 = vmatprep.mubr.f32.mxu0 0.0
  %508 = vmatmul.mubr.f32.gmra.mrb[0].mxu0 %v184
  %v509 = vpop.f32.mrb[0].mxu0
  %v510 = vadd.f32 %v84, %v509
  %v511 = vpop.f32.mrb[0].mxu0
  %512 = vmatprep.mubr.f32.mxu0 0.0
  %513 = vmatmul.mubr.f32.gmra.mrb[0].mxu0 %v187
  %v514 = vpop.f32.mrb[0].mxu0
  %v515 = vadd.f32 %v84, %v514
  %v516 = vpop.f32.mrb[0].mxu0
  %517 = vmatprep.mubr.f32.mxu0 0.0
  %518 = vmatmul.mubr.f32.gmra.mrb[0].mxu0 %v190
  %v519 = vpop.f32.mrb[0].mxu0
  %v520 = vadd.f32 %v84, %v519
  %v521 = vpop.f32.mrb[0].mxu0
  %522 = vmatprep.mubr.f32.mxu0 0.0
  %523 = vmatmul.mubr.f32.gmra.mrb[0].mxu0 %v193
  %v524 = vpop.f32.mrb[0].mxu0
  %v525 = vadd.f32 %v84, %v524
  %v526 = vpop.f32.mrb[0].mxu0
  %527 = vmatprep.mubr.f32.mxu0 0.0
  %528 = vmatmul.mubr.f32.gmra.mrb[0].mxu0 %v196
  %v529 = vpop.f32.mrb[0].mxu0
  %v530 = vadd.f32 %v84, %v529
  %v531 = vpop.f32.mrb[0].mxu0
  %532 = vmatprep.mubr.f32.mxu0 0.0
  %533 = vmatmul.mubr.f32.gmra.mrb[0].mxu0 %v199
  %v534 = vpop.f32.mrb[0].mxu0
  %v535 = vadd.f32 %v84, %v534
  %v536 = vpop.f32.mrb[0].mxu0
  %537 = vmatprep.mubr.f32.mxu0 0.0
  %538 = vmatmul.mubr.f32.gmra.mrb[0].mxu0 %v202
  %v539 = vpop.f32.mrb[0].mxu0
  %v540 = vadd.f32 %v84, %v539
  %v541 = vpop.f32.mrb[0].mxu0
  %542 = vmatprep.mubr.f32.mxu0 0.0
  %543 = vmatmul.mubr.f32.gmra.mrb[0].mxu0 %v205
  %v544 = vpop.f32.mrb[0].mxu0
  %v545 = vadd.f32 %v84, %v544
  %v546 = vpop.f32.mrb[0].mxu0
  %547 = vmatprep.mubr.f32.mxu0 0.0
  %548 = vmatmul.mubr.f32.gmra.mrb[0].mxu0 %v208
  %v549 = vpop.f32.mrb[0].mxu0
  %v550 = vadd.f32 %v84, %v549
  %v551 = vpop.f32.mrb[0].mxu0
  %552 = vmatprep.mubr.f32.mxu0 0.0
  %553 = vmatmul.mubr.f32.gmra.mrb[0].mxu0 %v211
  %v554 = vpop.f32.mrb[0].mxu0
  %v555 = vadd.f32 %v84, %v554
  %v556 = vpop.f32.mrb[0].mxu0
  %557 = vmatprep.mubr.f32.mxu0 0.0
  %558 = vmatmul.mubr.f32.gmra.mrb[0].mxu0 %v214
  %v559 = vpop.f32.mrb[0].mxu0
  %v560 = vadd.f32 %v84, %v559
  %v561 = vpop.f32.mrb[0].mxu0
  %562 = vmatprep.mubr.f32.mxu0 0.0
  %563 = vmatmul.mubr.f32.gmra.mrb[0].mxu0 %v217
  %v564 = vpop.f32.mrb[0].mxu0
  %v565 = vadd.f32 %v84, %v564
  %v566 = vpop.f32.mrb[0].mxu0
  %567 = vmatprep.mubr.f32.mxu0 0.0
  %568 = vmatmul.mubr.f32.gmra.mrb[0].mxu0 %v220
  %v569 = vpop.f32.mrb[0].mxu0
  %v570 = vadd.f32 %v84, %v569
  %v571 = vpop.f32.mrb[0].mxu0
  %572 = vmatprep.mubr.f32.mxu0 0.0
  %573 = vmatmul.mubr.f32.gmra.mrb[0].mxu0 %v223
  %v574 = vpop.f32.mrb[0].mxu0
  %v575 = vadd.f32 %v84, %v574
  %v576 = vpop.f32.mrb[0].mxu0
  %577 = vmatprep.mubr.f32.mxu0 0.0
  %578 = vmatmul.mubr.f32.gmra.mrb[0].mxu0 %v226
  %v579 = vpop.f32.mrb[0].mxu0
  %v580 = vadd.f32 %v84, %v579
  %v581 = vpop.f32.mrb[0].mxu0
  %582 = vmatprep.mubr.f32.mxu0 0.0
  %583 = vmatmul.mubr.f32.gmra.mrb[0].mxu0 %v229
  %v584 = vpop.f32.mrb[0].mxu0
  %v585 = vadd.f32 %v84, %v584
  %v586 = vpop.f32.mrb[0].mxu0
  %587 = vmatprep.mubr.f32.mxu0 0.0
  %588 = vmatmul.mubr.f32.gmra.mrb[0].mxu0 %v232
  %v589 = vpop.f32.mrb[0].mxu0
  %v590 = vadd.f32 %v84, %v589
  %v591 = vpop.f32.mrb[0].mxu0
  %592 = vmatprep.mubr.f32.mxu0 0.0
  %593 = vmatmul.mubr.f32.gmra.mrb[0].mxu0 %v235
  %v594 = vpop.f32.mrb[0].mxu0
  %v595 = vadd.f32 %v84, %v594
  %v596 = vpop.f32.mrb[0].mxu0
  %597 = vmatprep.mubr.f32.mxu0 0.0
  %598 = vmatmul.mubr.f32.gmra.mrb[0].mxu0 %v238
  %v599 = vpop.f32.mrb[0].mxu0
  %v600 = vadd.f32 %v84, %v599
  %v601 = vpop.f32.mrb[0].mxu0
  %602 = vmatprep.mubr.f32.mxu0 0.0
  %603 = vmatmul.mubr.f32.gmra.mrb[0].mxu0 %v241
  %v604 = vpop.f32.mrb[0].mxu0
  %v605 = vadd.f32 %v84, %v604
  %v606 = vpop.f32.mrb[0].mxu0
  %607 = vmatprep.mubr.f32.mxu0 0.0
  %608 = vmatmul.mubr.f32.gmra.mrb[0].mxu0 %v244
  %v609 = vpop.f32.mrb[0].mxu0
  %v610 = vadd.f32 %v84, %v609
  %v611 = vpop.f32.mrb[0].mxu0
  %612 = vmatprep.mubr.f32.mxu0 0.0
  %613 = vmatmul.mubr.f32.gmra.mrb[0].mxu0 %v247
  %v614 = vpop.f32.mrb[0].mxu0
  %v615 = vadd.f32 %v84, %v614
  %v616 = vpop.f32.mrb[0].mxu0
  %617 = vmatprep.mubr.f32.mxu0 0.0
  %618 = vmatmul.mubr.f32.gmra.mrb[0].mxu0 %v250
  %v619 = vpop.f32.mrb[0].mxu0
  %v620 = vadd.f32 %v84, %v619
  %v621 = vpop.f32.mrb[0].mxu0
  %622 = vmatprep.mubr.f32.mxu0 0.0
  %623 = vmatmul.mubr.f32.gmra.mrb[0].mxu0 %v253
  %v624 = vpop.f32.mrb[0].mxu0
  %v625 = vadd.f32 %v84, %v624
  %v626 = vpop.f32.mrb[0].mxu0
  %627 = vmatprep.mubr.f32.mxu0 0.0
  %628 = vmatmul.mubr.f32.gmra.mrb[0].mxu0 %v256
  %v629 = vpop.f32.mrb[0].mxu0
  %v630 = vadd.f32 %v84, %v629
  %v631 = vpop.f32.mrb[0].mxu0
  %632 = vmatprep.mubr.f32.mxu0 0.0
  %633 = vmatmul.mubr.f32.gmra.mrb[0].mxu0 %v259
  %v634 = vpop.f32.mrb[0].mxu0
  %v635 = vadd.f32 %v84, %v634
  %v636 = vpop.f32.mrb[0].mxu0
  %637 = vmatprep.mubr.f32.mxu0 0.0
  %638 = vmatmul.mubr.f32.gmra.mrb[0].mxu0 %v262
  %v639 = vpop.f32.mrb[0].mxu0
  %v640 = vadd.f32 %v84, %v639
  %v641 = vpop.f32.mrb[0].mxu0
  %642 = vmatprep.mubr.f32.mxu0 0.0
  %643 = vmatmul.mubr.f32.gmra.mrb[0].mxu0 %v265
  %v644 = vpop.f32.mrb[0].mxu0
  %v645 = vadd.f32 %v84, %v644
  %v646 = vpop.f32.mrb[0].mxu0
  %647 = vmatprep.mubr.f32.mxu0 0.0
  %648 = vmatmul.mubr.f32.gmra.mrb[0].mxu0 %v268
  %v649 = vpop.f32.mrb[0].mxu0
  %v650 = vadd.f32 %v84, %v649
  %v651 = vpop.f32.mrb[0].mxu0
  %652 = vmatprep.mubr.f32.mxu0 0.0
  %653 = vmatmul.mubr.f32.gmra.mrb[0].mxu0 %v271
  %v654 = vpop.f32.mrb[0].mxu0
  %v655 = vadd.f32 %v84, %v654
  %v656 = vpop.f32.mrb[0].mxu0
  %657 = vmatprep.mubr.f32.mxu0 0.0
  %658 = vmatmul.mubr.f32.gmra.mrb[0].mxu0 %v274
  %v659 = vpop.f32.mrb[0].mxu0
  %v660 = vadd.f32 %v84, %v659
  %v661 = vpop.f32.mrb[0].mxu0
  %662 = vmatprep.mubr.f32.mxu0 0.0
  %663 = vmatmul.mubr.f32.gmra.mrb[0].mxu0 %v277
  %v664 = vpop.f32.mrb[0].mxu0
  %v665 = vadd.f32 %v84, %v664
  %v666 = vpop.f32.mrb[0].mxu0
  %667 = vdwg.mxu0
  %vm668 = vcmask 15360
  %669 = vst.msk [vmem:[%s3] sm:$0xff] %vm668, %v350
  %670 = vst.msk [vmem:[%s3 + $0x8] sm:$0xff] %vm668, %v355
  %671 = vst.msk [vmem:[%s3 + $0x10] sm:$0xff] %vm668, %v360
  %672 = vst.msk [vmem:[%s3 + $0x18] sm:$0xff] %vm668, %v365
  %673 = vst.msk [vmem:[%s3 + $0x20] sm:$0xff] %vm668, %v370
  %674 = vst.msk [vmem:[%s3 + $0x28] sm:$0xff] %vm668, %v375
  %675 = vst.msk [vmem:[%s3 + $0x30] sm:$0xff] %vm668, %v380
  %676 = vst.msk [vmem:[%s3 + $0x38] sm:$0xff] %vm668, %v385
  %677 = vst.msk [vmem:[%s3 + $0x40] sm:$0xff] %vm668, %v390
  %678 = vst.msk [vmem:[%s3 + $0x48] sm:$0xff] %vm668, %v395
  %679 = vst.msk [vmem:[%s3 + $0x50] sm:$0xff] %vm668, %v400
  %680 = vst.msk [vmem:[%s3 + $0x58] sm:$0xff] %vm668, %v405
  %681 = vst.msk [vmem:[%s3 + $0x60] sm:$0xff] %vm668, %v410
  %682 = vst.msk [vmem:[%s3 + $0x68] sm:$0xff] %vm668, %v415
  %683 = vst.msk [vmem:[%s3 + $0x70] sm:$0xff] %vm668, %v420
  %684 = vst.msk [vmem:[%s3 + $0x78] sm:$0xff] %vm668, %v425
  %685 = vst.msk [vmem:[%s3 + $0x80] sm:$0xff] %vm668, %v430
  %686 = vst.msk [vmem:[%s3 + $0x88] sm:$0xff] %vm668, %v435
  %687 = vst.msk [vmem:[%s3 + $0x90] sm:$0xff] %vm668, %v440
  %688 = vst.msk [vmem:[%s3 + $0x98] sm:$0xff] %vm668, %v445
  %689 = vst.msk [vmem:[%s3 + $0xa0] sm:$0xff] %vm668, %v450
  %690 = vst.msk [vmem:[%s3 + $0xa8] sm:$0xff] %vm668, %v455
  %691 = vst.msk [vmem:[%s3 + $0xb0] sm:$0xff] %vm668, %v460
  %692 = vst.msk [vmem:[%s3 + $0xb8] sm:$0xff] %vm668, %v465
  %693 = vst.msk [vmem:[%s3 + $0xc0] sm:$0xff] %vm668, %v470
  %694 = vst.msk [vmem:[%s3 + $0xc8] sm:$0xff] %vm668, %v475
  %695 = vst.msk [vmem:[%s3 + $0xd0] sm:$0xff] %vm668, %v480
  %696 = vst.msk [vmem:[%s3 + $0xd8] sm:$0xff] %vm668, %v485
  %697 = vst.msk [vmem:[%s3 + $0xe0] sm:$0xff] %vm668, %v490
  %698 = vst.msk [vmem:[%s3 + $0xe8] sm:$0xff] %vm668, %v495
  %699 = vst.msk [vmem:[%s3 + $0xf0] sm:$0xff] %vm668, %v500
  %700 = vst.msk [vmem:[%s3 + $0xf8] sm:$0xff] %vm668, %v505
  %701 = vst.msk [vmem:[%s3 + $0x100] sm:$0xff] %vm668, %v510
  %702 = vst.msk [vmem:[%s3 + $0x108] sm:$0xff] %vm668, %v515
  %703 = vst.msk [vmem:[%s3 + $0x110] sm:$0xff] %vm668, %v520
  %704 = vst.msk [vmem:[%s3 + $0x118] sm:$0xff] %vm668, %v525
  %705 = vst.msk [vmem:[%s3 + $0x120] sm:$0xff] %vm668, %v530
  %706 = vst.msk [vmem:[%s3 + $0x128] sm:$0xff] %vm668, %v535
  %707 = vst.msk [vmem:[%s3 + $0x130] sm:$0xff] %vm668, %v540
  %708 = vst.msk [vmem:[%s3 + $0x138] sm:$0xff] %vm668, %v545
  %709 = vst.msk [vmem:[%s3 + $0x140] sm:$0xff] %vm668, %v550
  %710 = vst.msk [vmem:[%s3 + $0x148] sm:$0xff] %vm668, %v555
  %711 = vst.msk [vmem:[%s3 + $0x150] sm:$0xff] %vm668, %v560
  %712 = vst.msk [vmem:[%s3 + $0x158] sm:$0xff] %vm668, %v565
  %713 = vst.msk [vmem:[%s3 + $0x160] sm:$0xff] %vm668, %v570
  %714 = vst.msk [vmem:[%s3 + $0x168] sm:$0xff] %vm668, %v575
  %715 = vst.msk [vmem:[%s3 + $0x170] sm:$0xff] %vm668, %v580
  %716 = vst.msk [vmem:[%s3 + $0x178] sm:$0xff] %vm668, %v585
  %717 = vst.msk [vmem:[%s3 + $0x180] sm:$0xff] %vm668, %v590
  %718 = vst.msk [vmem:[%s3 + $0x188] sm:$0xff] %vm668, %v595
  %719 = vst.msk [vmem:[%s3 + $0x190] sm:$0xff] %vm668, %v600
  %720 = vst.msk [vmem:[%s3 + $0x198] sm:$0xff] %vm668, %v605
  %721 = vst.msk [vmem:[%s3 + $0x1a0] sm:$0xff] %vm668, %v610
  %722 = vst.msk [vmem:[%s3 + $0x1a8] sm:$0xff] %vm668, %v615
  %723 = vst.msk [vmem:[%s3 + $0x1b0] sm:$0xff] %vm668, %v620
  %724 = vst.msk [vmem:[%s3 + $0x1b8] sm:$0xff] %vm668, %v625
  %725 = vst.msk [vmem:[%s3 + $0x1c0] sm:$0xff] %vm668, %v630
  %726 = vst.msk [vmem:[%s3 + $0x1c8] sm:$0xff] %vm668, %v635
  %727 = vst.msk [vmem:[%s3 + $0x1d0] sm:$0xff] %vm668, %v640
  %728 = vst.msk [vmem:[%s3 + $0x1d8] sm:$0xff] %vm668, %v645
  %729 = vst.msk [vmem:[%s3 + $0x1e0] sm:$0xff] %vm668, %v650
  %730 = vst.msk [vmem:[%s3 + $0x1e8] sm:$0xff] %vm668, %v655
  %731 = vst.msk [vmem:[%s3 + $0x1f0] sm:$0xff] %vm668, %v660
  %732 = vst.msk [vmem:[%s3 + $0x1f8] sm:$0xff] %vm668, %v665
  // Predicated region
  $region14: #{guided_cxt_atten.3} parent=0 // pred_check
    _
  $region15: #{guided_cxt_atten.3} parent=0 // pred_check_branch
    %734 = sbr.rel (0) target = $region17
  $region16: #{guided_cxt_atten.3} parent=0 // pred_region
    _
  $region17: #{guided_cxt_atten.3} parent=0 // pred_fallthru
    _
  // Predicated region
  $region18: #{guided_cxt_atten.3} parent=0 // pred_check
    _
  $region19: #{guided_cxt_atten.3} parent=0 // pred_check_branch
    %736 = sbr.rel (0) target = $region21
  $region20: #{guided_cxt_atten.3} parent=0 // pred_region
    _
  $region21: #{guided_cxt_atten.3} parent=0 // pred_fallthru
    _

// kernel: guided_cxt_atten.4
$region0: #{guided_cxt_atten.4}
  #allocation0 [shape = 'u32[]', space=smem, size = 0x4, offset = 0x4, fixed_abs, tag = 'smem constant byte address 0x4 - core index']
  #allocation1 [shape = 'u32[144,128]{1,0:T(1,128)}', space=vmem, size = 0x12000, scoped, tag = 'internal scratch']
  #allocation2 [shape = 'f32[32,1]{1,0:T(8,128)}', space=vmem, size = 0x4000, scoped, tag = 'scratch operand']
  #allocation3 [shape = 'f32[32,1]{1,0:T(8,128)}', space=vmem, size = 0x4000, scoped, tag = 'scratch operand']
  %s0 = inlined_call_operand.vmem [shape: f32[2,64,128], index: 0, kind: input, shape index: {}, may-alias: {0,1}]
  %s1 = inlined_call_operand.vmem [shape: f32[2,64,128], index: 1, kind: input, shape index: {}, may-alias: {0,1}]
  %s2 = inlined_call_operand.vmem [shape: bf16[2,64,128], index: 2, kind: input, shape index: {}]
  %s3 = inlined_call_operand.vmem [shape: f32[2,64,128], index: 3, kind: output, shape index: {}]
  %s4 = sld [smem:[#allocation0]]
  $region53: #{guided_cxt_atten.4} parent=0
    _
  %s6 = ssub.s32 1, %s4
  %s7 = scalar_select 0, %s6, %s4
  loop: start=0, step=1, limit=10
  $region2: #{guided_cxt_atten.4} parent=0 // loop_pre_header
    _
  $region3: #{guided_cxt_atten.4} parent=0 // loop_header
    %s9 = sphi 0, %s13
    %p10 = scmp.ge.s32.totalorder %s9, 10
    %s16 = sphi 0, %s35
    %s17 = sphi 0, %s31
    %s18 = sphi 0, %s27
    %s19 = sphi 0, %s16
    %s20 = sphi 0, %s17
    %s21 = sphi 0, %s18
    %s22 = sphi 0, %s19
    %s23 = sphi 0, %s20
    %s24 = sphi 0, %s21
    %s40 = sphi 0, %s42
    %s43 = sphi 0, %s40
    %s44 = sphi 0, %s43
    %s60 = sphi 0, %s44
    %s68 = sphi 0, %s70
    %s71 = sphi 0, %s68
    %s72 = sphi 0, %s71
    %s88 = sphi 0, %s72
    %s96 = sphi 0, %s98
    %s99 = sphi 0, %s96
    %s100 = sphi 0, %s99
    %s116 = sphi 0, %s100
    %s124 = sphi 0, %s126
    %s127 = sphi 0, %s124
    %s128 = sphi 0, %s127
    %s144 = sphi 0, %s128
  $region4: #{guided_cxt_atten.4} parent=0 // loop_header_branch
    %12 = sbr.rel (%p10) target = $region8
  $region5: #{guided_cxt_atten.4} parent=0 // loop_body
    %s14 = ssub.s32 %s9, 1
    %s15 = ssub.s32 %s9, 2
    %s25 = sadd.s32 1, %s18
    %p26 = scmp.ge.s32.totalorder %s25, 2
    %s27 = scalar_select %p26, 0, %s25
    %s28 = sadd.s32 1, %s17
    %s29 = scalar_select %p26, %s28, %s17
    %p30 = scmp.ge.s32.totalorder %s29, 2
    %s31 = scalar_select %p30, 0, %s29
    %s32 = sadd.s32 1, %s16
    %s33 = scalar_select %p30, %s32, %s16
    %p34 = scmp.ge.s32.totalorder %s33, 2
    %s35 = scalar_select %p34, 0, %s33
    %s36 = ssub.s32 %s16, %s35
    %s37 = ssub.s32 %s17, %s31
    %s38 = sor.u32 %s36, %s37
    %p39 = scmp.eq.s32.totalorder %s38, 0
    %s41 = sadd.s32 %s40, 1
    %s42 = scalar_select %p39, %s40, %s41
    %p45 = pneg %p39
    %p46 = scmp.eq.s32.totalorder %s9, 7
    %p47 = por %p45, %p46
    %p48 = scmp.ne.s32.totalorder %s40, %s43
    %p49 = scmp.eq.s32.totalorder %s9, 0
    %p50 = por %p48, %p49
    %p51 = scmp.ne.s32.totalorder %s40, %s43
    %p52 = scmp.eq.s32.totalorder %s14, 7
    %p53 = por %p51, %p52
    %p54 = scmp.ne.s32.totalorder %s43, %s44
    %p55 = scmp.eq.s32.totalorder %s14, 0
    %p56 = por %p54, %p55
    %p57 = scmp.ne.s32.totalorder %s43, %s44
    %p58 = scmp.eq.s32.totalorder %s15, 7
    %p59 = por %p57, %p58
    %p61 = scmp.ne.s32.totalorder %s44, %s60
    %p62 = scmp.eq.s32.totalorder %s15, 0
    %p63 = por %p61, %p62
    %s64 = ssub.s32 %s16, %s35
    %s65 = ssub.s32 %s18, %s27
    %s66 = sor.u32 %s64, %s65
    %p67 = scmp.eq.s32.totalorder %s66, 0
    %s69 = sadd.s32 %s68, 1
    %s70 = scalar_select %p67, %s68, %s69
    %p73 = pneg %p67
    %p74 = scmp.eq.s32.totalorder %s9, 7
    %p75 = por %p73, %p74
    %p76 = scmp.ne.s32.totalorder %s68, %s71
    %p77 = scmp.eq.s32.totalorder %s9, 0
    %p78 = por %p76, %p77
    %p79 = scmp.ne.s32.totalorder %s68, %s71
    %p80 = scmp.eq.s32.totalorder %s14, 7
    %p81 = por %p79, %p80
    %p82 = scmp.ne.s32.totalorder %s71, %s72
    %p83 = scmp.eq.s32.totalorder %s14, 0
    %p84 = por %p82, %p83
    %p85 = scmp.ne.s32.totalorder %s71, %s72
    %p86 = scmp.eq.s32.totalorder %s15, 7
    %p87 = por %p85, %p86
    %p89 = scmp.ne.s32.totalorder %s72, %s88
    %p90 = scmp.eq.s32.totalorder %s15, 0
    %p91 = por %p89, %p90
    %s92 = ssub.s32 %s16, %s35
    %s93 = ssub.s32 %s18, %s27
    %s94 = sor.u32 %s92, %s93
    %p95 = scmp.eq.s32.totalorder %s94, 0
    %s97 = sadd.s32 %s96, 1
    %s98 = scalar_select %p95, %s96, %s97
    %p101 = pneg %p95
    %p102 = scmp.eq.s32.totalorder %s9, 7
    %p103 = por %p101, %p102
    %p104 = scmp.ne.s32.totalorder %s96, %s99
    %p105 = scmp.eq.s32.totalorder %s9, 0
    %p106 = por %p104, %p105
    %p107 = scmp.ne.s32.totalorder %s96, %s99
    %p108 = scmp.eq.s32.totalorder %s14, 7
    %p109 = por %p107, %p108
    %p110 = scmp.ne.s32.totalorder %s99, %s100
    %p111 = scmp.eq.s32.totalorder %s14, 0
    %p112 = por %p110, %p111
    %p113 = scmp.ne.s32.totalorder %s99, %s100
    %p114 = scmp.eq.s32.totalorder %s15, 7
    %p115 = por %p113, %p114
    %p117 = scmp.ne.s32.totalorder %s100, %s116
    %p118 = scmp.eq.s32.totalorder %s15, 0
    %p119 = por %p117, %p118
    %s120 = ssub.s32 %s16, %s35
    %s121 = ssub.s32 %s17, %s31
    %s122 = sor.u32 %s120, %s121
    %p123 = scmp.eq.s32.totalorder %s122, 0
    %s125 = sadd.s32 %s124, 1
    %s126 = scalar_select %p123, %s124, %s125
    %p129 = pneg %p123
    %p130 = scmp.eq.s32.totalorder %s9, 7
    %p131 = por %p129, %p130
    %p132 = scmp.ne.s32.totalorder %s124, %s127
    %p133 = scmp.eq.s32.totalorder %s9, 0
    %p134 = por %p132, %p133
    %p135 = scmp.ne.s32.totalorder %s124, %s127
    %p136 = scmp.eq.s32.totalorder %s14, 7
    %p137 = por %p135, %p136
    %p138 = scmp.ne.s32.totalorder %s127, %s128
    %p139 = scmp.eq.s32.totalorder %s14, 0
    %p140 = por %p138, %p139
    %p141 = scmp.ne.s32.totalorder %s127, %s128
    %p142 = scmp.eq.s32.totalorder %s15, 7
    %p143 = por %p141, %p142
    %p145 = scmp.ne.s32.totalorder %s128, %s144
    %p146 = scmp.eq.s32.totalorder %s15, 0
    %p147 = por %p145, %p146
    %p148 = scmp.le.s32.totalorder 1, %s9
    %p149 = scmp.lt.s32.totalorder %s9, 9
    %p150 = pnand %p148, %p149
    %p151 = pneg %p150
    // Predicated region
    $region9: #{guided_cxt_atten.4} parent=5 // pred_check
      _
    $region10: #{guided_cxt_atten.4} parent=5 // pred_check_branch
      %153 = sbr.rel (%p150) target = $region12
    $region11: #{guided_cxt_atten.4} parent=5 // pred_region
      %s154 = ssub.s32 %s9, 1
    $region12: #{guided_cxt_atten.4} parent=5 // pred_fallthru
      _
    %p155 = scmp.lt.s32.totalorder %s9, 8
    // Predicated region
    $region13: #{guided_cxt_atten.4} parent=5 // pred_check
      %p156 = pneg %p155
    $region14: #{guided_cxt_atten.4} parent=5 // pred_check_branch
      %158 = sbr.rel (%p156) target = $region16
    $region15: #{guided_cxt_atten.4} parent=5 // pred_region
      // Predicated region
      $region17: #{guided_cxt_atten.4} parent=15 // pred_check
        %p159 = pneg %p50
      $region18: #{guided_cxt_atten.4} parent=15 // pred_check_branch
        %161 = sbr.rel (%p159) target = $region20
      $region19: #{guided_cxt_atten.4} parent=15 // pred_region
        %s162 = smul.u32 4, %s17
        %p163 = scmp.lt.s32.totalorder %s16, 1
        %s164 = scalar_select %p163, %s16, 1
        %p165 = scmp.lt.s32.totalorder %s162, 7
        %s166 = scalar_select %p165, %s162, 7
        %s167 = smul.addr %s164, 8
        %s168 = sadd.s32 %s166, %s167
        %s169 = smul.addr %s168, 8
        %s170 = scalar_lea.vmem %s0, %s169
        %s171 = smul.u32 4, %s17
      $region20: #{guided_cxt_atten.4} parent=15 // pred_fallthru
        _
      // Predicated region
      $region21: #{guided_cxt_atten.4} parent=15 // pred_check
        %p172 = pneg %p78
      $region22: #{guided_cxt_atten.4} parent=15 // pred_check_branch
        %174 = sbr.rel (%p172) target = $region24
      $region23: #{guided_cxt_atten.4} parent=15 // pred_region
        %s175 = smul.u32 4, %s18
        %p176 = scmp.lt.s32.totalorder %s16, 1
        %s177 = scalar_select %p176, %s16, 1
        %p178 = scmp.lt.s32.totalorder %s175, 7
        %s179 = scalar_select %p178, %s175, 7
        %s180 = smul.addr %s177, 8
        %s181 = sadd.s32 %s179, %s180
        %s182 = smul.addr %s181, 8
        %s183 = scalar_lea.vmem %s1, %s182
        %s184 = smul.u32 4, %s18
      $region24: #{guided_cxt_atten.4} parent=15 // pred_fallthru
        _
      // Predicated region
      $region25: #{guided_cxt_atten.4} parent=15 // pred_check
        %p185 = pneg %p106
      $region26: #{guided_cxt_atten.4} parent=15 // pred_check_branch
        %187 = sbr.rel (%p185) target = $region28
      $region27: #{guided_cxt_atten.4} parent=15 // pred_region
        %s188 = smul.u32 4, %s18
        %p189 = scmp.lt.s32.totalorder %s16, 1
        %s190 = scalar_select %p189, %s16, 1
        %p191 = scmp.lt.s32.totalorder %s188, 7
        %s192 = scalar_select %p191, %s188, 7
        %s193 = smul.addr %s190, 8
        %s194 = sadd.s32 %s192, %s193
        %s195 = smul.addr %s194, 4
        %s196 = scalar_lea.vmem %s2, %s195
        %s197 = smul.u32 4, %s18
      $region28: #{guided_cxt_atten.4} parent=15 // pred_fallthru
        _
    $region16: #{guided_cxt_atten.4} parent=5 // pred_fallthru
      _
    %p198 = scmp.le.s32.totalorder 1, %s9
    %p199 = scmp.lt.s32.totalorder %s9, 9
    %p200 = pnand %p198, %p199
    %p201 = pneg %p200
    // Predicated region
    $region29: #{guided_cxt_atten.4} parent=5 // pred_check
      _
    $region30: #{guided_cxt_atten.4} parent=5 // pred_check_branch
      %203 = sbr.rel (%p200) target = $region32
    $region31: #{guided_cxt_atten.4} parent=5 // pred_region
      %s204 = ssub.s32 %s9, 1
      %s205 = smul.u32 4, %s20
      %p206 = scmp.lt.s32.totalorder %s19, 1
      %s207 = scalar_select %p206, %s19, 1
      %p208 = scmp.lt.s32.totalorder %s205, 7
      %s209 = scalar_select %p208, %s205, 7
      %s210 = smul.addr %s207, 8
      %s211 = sadd.s32 %s209, %s210
      %s212 = smul.addr %s211, 8
      %s213 = scalar_lea.vmem %s0, %s212
      %p214 = pneg %p56
      %p215 = pneg %p53
      %s216 = smul.u32 4, %s21
      %p217 = scmp.lt.s32.totalorder %s19, 1
      %s218 = scalar_select %p217, %s19, 1
      %p219 = scmp.lt.s32.totalorder %s216, 7
      %s220 = scalar_select %p219, %s216, 7
      %s221 = smul.addr %s218, 8
      %s222 = sadd.s32 %s220, %s221
      %s223 = smul.addr %s222, 8
      %s224 = scalar_lea.vmem %s1, %s223
      %p225 = pneg %p84
      %p226 = pneg %p81
      %s227 = smul.u32 4, %s21
      %p228 = scmp.lt.s32.totalorder %s19, 1
      %s229 = scalar_select %p228, %s19, 1
      %p230 = scmp.lt.s32.totalorder %s227, 7
      %s231 = scalar_select %p230, %s227, 7
      %s232 = smul.addr %s229, 8
      %s233 = sadd.s32 %s231, %s232
      %s234 = smul.addr %s233, 4
      %s235 = scalar_lea.vmem %s2, %s234
      %p236 = pneg %p112
      %p237 = pneg %p109
      %p238 = pneg %p140
      %p239 = pneg %p137
      %s240 = smul.u32 4, %s20
      %p241 = scmp.lt.s32.totalorder %s19, 1
      %s242 = scalar_select %p241, %s19, 1
      %p243 = scmp.lt.s32.totalorder %s240, 7
      %s244 = scalar_select %p243, %s240, 7
      %s245 = smul.addr %s242, 8
      %s246 = sadd.s32 %s244, %s245
      %s247 = smul.addr %s246, 8
      %s248 = scalar_lea.vmem %s3, %s247
      %s249 = smul.u32 4, %s20
      %p250 = scmp.lt.s32.totalorder %s19, 1
      %s251 = scalar_select %p250, %s19, 1
      %p252 = scmp.lt.s32.totalorder %s249, 7
      %s253 = scalar_select %p252, %s249, 7
      %s254 = smul.addr %s251, 8
      %s255 = sadd.s32 %s253, %s254
      %s256 = smul.addr %s255, 8
      %s257 = scalar_lea.vmem %s0, %s256
      %s258 = smul.u32 4, %s20
      %s259 = smul.u32 4, %s21
      %p260 = scmp.lt.s32.totalorder %s19, 1
      %s261 = scalar_select %p260, %s19, 1
      %p262 = scmp.lt.s32.totalorder %s259, 7
      %s263 = scalar_select %p262, %s259, 7
      %s264 = smul.addr %s261, 8
      %s265 = sadd.s32 %s263, %s264
      %s266 = smul.addr %s265, 8
      %s267 = scalar_lea.vmem %s1, %s266
      %s268 = smul.u32 4, %s21
      %s269 = smul.u32 4, %s21
      %p270 = scmp.lt.s32.totalorder %s19, 1
      %s271 = scalar_select %p270, %s19, 1
      %p272 = scmp.lt.s32.totalorder %s269, 7
      %s273 = scalar_select %p272, %s269, 7
      %s274 = smul.addr %s271, 8
      %s275 = sadd.s32 %s273, %s274
      %s276 = smul.addr %s275, 4
      %s277 = scalar_lea.vmem %s2, %s276
      %s278 = smul.u32 4, %s21
      %s279 = smul.u32 4, %s20
      %p280 = scmp.lt.s32.totalorder %s19, 1
      %s281 = scalar_select %p280, %s19, 1
      %p282 = scmp.lt.s32.totalorder %s279, 7
      %s283 = scalar_select %p282, %s279, 7
      %s284 = smul.addr %s281, 8
      %s285 = sadd.s32 %s283, %s284
      %s286 = smul.addr %s285, 8
      %s287 = scalar_lea.vmem %s3, %s286
      %s288 = smul.u32 4, %s20
      %p290 = scmp.eq.s32.totalorder %s21, 0
      // Predicated region
      $region33: #{guided_cxt_atten.4} parent=31 // pred_check
        %p291 = pneg %p290
      $region34: #{guided_cxt_atten.4} parent=31 // pred_check_branch
        %293 = sbr.rel (%p291) target = $region36
      $region35: #{guided_cxt_atten.4} parent=31 // pred_region
        %vm294 = vcmask 7168
        %295 = vst.msk [vmem:[#allocation2] sm:$0xff] %vm294, -inf
        %296 = vst.msk [vmem:[#allocation2 + $0x8] sm:$0xff] %vm294, -inf
        %297 = vst.msk [vmem:[#allocation2 + $0x10] sm:$0xff] %vm294, -inf
        %298 = vst.msk [vmem:[#allocation2 + $0x18] sm:$0xff] %vm294, -inf
        %299 = vst.msk [vmem:[#allocation3] sm:$0xff] %vm294, 0.0
        %300 = vst.msk [vmem:[#allocation3 + $0x8] sm:$0xff] %vm294, 0.0
        %301 = vst.msk [vmem:[#allocation3 + $0x10] sm:$0xff] %vm294, 0.0
        %302 = vst.msk [vmem:[#allocation3 + $0x18] sm:$0xff] %vm294, 0.0
        %303 = vst [vmem:[%s287] sm:$0xff] 0.0
        %304 = vst [vmem:[%s287 + $0x8] sm:$0xff] 0.0
        %305 = vst [vmem:[%s287 + $0x10] sm:$0xff] 0.0
        %306 = vst [vmem:[%s287 + $0x18] sm:$0xff] 0.0
      $region36: #{guided_cxt_atten.4} parent=31 // pred_fallthru
        _
      %v307 = vld [vmem:[%s257] sm:$0xff]
      %v308 = vld [vmem:[%s257 + $0x8] sm:$0xff]
      %v309 = vld [vmem:[%s257 + $0x10] sm:$0xff]
      %v310 = vld [vmem:[%s257 + $0x18] sm:$0xff]
      %v311 = vld [vmem:[%s267] sm:$0xff]
      %v312 = vld [vmem:[%s267 + $0x8] sm:$0xff]
      %v313 = vld [vmem:[%s267 + $0x10] sm:$0xff]
      %v314 = vld [vmem:[%s267 + $0x18] sm:$0xff]
      %v315 = vmul.f32 %v311, %v311
      %v316 = vmul.f32 %v312, %v312
      %v317 = vmul.f32 %v313, %v313
      %v318 = vmul.f32 %v314, %v314
      %319 = vadd.xlane.f32.xlu0 %v315
      %v320 = vpop.xlane.xlu0 %319
      %321 = vadd.xlane.f32.xlu0 %v316
      %v322 = vpop.xlane.xlu0 %321
      %323 = vadd.xlane.f32.xlu0 %v317
      %v324 = vpop.xlane.xlu0 %323
      %325 = vadd.xlane.f32.xlu0 %v318
      %v326 = vpop.xlane.xlu0 %325
      %vm327 = vcmp.gt.f32.partialorder %v320, 1e-08
      %vm328 = vcmp.gt.f32.partialorder %v322, 1e-08
      %vm329 = vcmp.gt.f32.partialorder %v324, 1e-08
      %vm330 = vcmp.gt.f32.partialorder %v326, 1e-08
      %v331 = vrsqrt.pop %v320
      %v332 = vrsqrt.pop %v322
      %v333 = vrsqrt.pop %v324
      %v334 = vrsqrt.pop %v326
      %v335 = vsel %vm327, %v331, 10000.0
      %v336 = vsel %vm328, %v332, 10000.0
      %v337 = vsel %vm329, %v333, 10000.0
      %v338 = vsel %vm330, %v334, 10000.0
      %v339 = vmul.f32 %v311, %v335
      %v340 = vmul.f32 %v312, %v336
      %v341 = vmul.f32 %v313, %v337
      %v342 = vmul.f32 %v314, %v338
      %343 = vmatprep.subr.mxu0 0.0
      %344 = vmatpush1.xpose.msra.mxu0 %v339
      %345 = vmatprep.subr.mxu0 0.0
      %346 = vmatpush1.xpose.msra.mxu0 %v340
      %347 = vmatprep.subr.mxu0 0.0
      %348 = vmatpush1.xpose.msra.mxu0 %v341
      %349 = vmatprep.subr.mxu0 0.0
      %350 = vmatpush1.xpose.msra.mxu0 %v342
      %351 = vmatprep.subr.mxu0 0.0
      %352 = vmatpush1.xpose.msra.mxu0 0.0
      %353 = vmatprep.subr.mxu0 0.0
      %354 = vmatpush1.xpose.msra.mxu0 0.0
      %355 = vmatprep.subr.mxu0 0.0
      %356 = vmatpush1.xpose.msra.mxu0 0.0
      %357 = vmatprep.subr.mxu0 0.0
      %358 = vmatpush1.xpose.msra.mxu0 0.0
      %359 = vmatprep.subr.mxu0 0.0
      %360 = vmatpush1.xpose.msra.mxu0 0.0
      %361 = vmatprep.subr.mxu0 0.0
      %362 = vmatpush1.xpose.msra.mxu0 0.0
      %363 = vmatprep.subr.mxu0 0.0
      %364 = vmatpush1.xpose.msra.mxu0 0.0
      %365 = vmatprep.subr.mxu0 0.0
      %366 = vmatpush1.xpose.msra.mxu0 0.0
      %367 = vmatprep.subr.mxu0 0.0
      %368 = vmatpush1.xpose.msra.mxu0 0.0
      %369 = vmatprep.subr.mxu0 0.0
      %370 = vmatpush1.xpose.msra.mxu0 0.0
      %371 = vmatprep.subr.mxu0 0.0
      %372 = vmatpush1.xpose.msra.mxu0 0.0
      %373 = vmatprep.subr.mxu0 0.0
      %374 = vmatpush1.xpose.msra.mxu0 0.0
      %375 = vmatprep.subr.mxu0 0.0
      %376 = vmatpush1.xpose.msra.mxu0 0.0
      %377 = vmatprep.subr.mxu0 0.0
      %378 = vmatpush1.xpose.msra.mxu0 0.0
      %379 = vmatprep.subr.mxu0 0.0
      %380 = vmatpush1.xpose.msra.mxu0 0.0
      %381 = vmatprep.subr.mxu0 0.0
      %382 = vmatpush1.xpose.msra.mxu0 0.0
      %383 = vmatprep.subr.mxu0 0.0
      %384 = vmatpush1.xpose.msra.mxu0 0.0
      %385 = vmatprep.subr.mxu0 0.0
      %386 = vmatpush1.xpose.msra.mxu0 0.0
      %387 = vmatprep.subr.mxu0 0.0
      %388 = vmatpush1.xpose.msra.mxu0 0.0
      %389 = vmatprep.subr.mxu0 0.0
      %390 = vmatpush1.xpose.msra.mxu0 0.0
      %391 = vmatprep.subr.mxu0 0.0
      %392 = vmatpush1.xpose.msra.mxu0 0.0
      %393 = vmatprep.subr.mxu0 0.0
      %394 = vmatpush1.xpose.msra.mxu0 0.0
      %395 = vmatprep.subr.mxu0 0.0
      %396 = vmatpush1.xpose.msra.mxu0 0.0
      %397 = vmatprep.subr.mxu0 0.0
      %398 = vmatpush1.xpose.msra.mxu0 0.0
      %399 = vmatprep.subr.mxu0 0.0
      %400 = vmatpush1.xpose.msra.mxu0 0.0
      %401 = vmatprep.subr.mxu0 0.0
      %402 = vmatpush1.xpose.msra.mxu0 0.0
      %403 = vmatprep.subr.mxu0 0.0
      %404 = vmatpush1.xpose.msra.mxu0 0.0
      %405 = vmatprep.subr.mxu0 0.0
      %406 = vmatpush1.xpose.msra.mxu0 0.0
      %407 = vmatprep.mubr.f32.mxu0 0.0
      %408 = vmatmul.mubr.f32.gmra.mrb[0].mxu0 %v307
      %v409 = vpop.f32.mrb[0].mxu0
      %v410 = vadd.f32 0.0, %v409
      %v411 = vpop.f32.mrb[0].mxu0
      %412 = vmatprep.mubr.f32.mxu0 0.0
      %413 = vmatmul.mubr.f32.gmra.mrb[0].mxu0 %v308
      %v414 = vpop.f32.mrb[0].mxu0
      %v415 = vadd.f32 0.0, %v414
      %v416 = vpop.f32.mrb[0].mxu0
      %417 = vmatprep.mubr.f32.mxu0 0.0
      %418 = vmatmul.mubr.f32.gmra.mrb[0].mxu0 %v309
      %v419 = vpop.f32.mrb[0].mxu0
      %v420 = vadd.f32 0.0, %v419
      %v421 = vpop.f32.mrb[0].mxu0
      %422 = vmatprep.mubr.f32.mxu0 0.0
      %423 = vmatmul.mubr.f32.gmra.mrb[0].mxu0 %v310
      %v424 = vpop.f32.mrb[0].mxu0
      %v425 = vadd.f32 0.0, %v424
      %v426 = vpop.f32.mrb[0].mxu0
      %427 = vdwg.mxu0
      %v428 = vlaneseq
      %v429 = vshrl.u32 %v428, 7
      %v430 = vadd.s32 %v429, 8
      %v431 = vadd.s32 %v429, 16
      %v432 = vadd.s32 %v429, 24
      %v433 = vlaneseq
      %v434 = vand.u32 %v433, 127
      %p435 = scmp.eq.s32.totalorder %s20, %s21
      %vm436 = vcmp.eq.s32.totalorder %v429, %v434
      %vm437 = vcmp.eq.s32.totalorder %v430, %v434
      %vm438 = vcmp.eq.s32.totalorder %v431, %v434
      %vm439 = vcmp.eq.s32.totalorder %v432, %v434
      %s440 = scalar_select %p435, 1, 0
      %v441 = vstv %s440
      %vm442 = vcmp.eq.s32.totalorder %v441, 1
      %vm443 = vmand %vm442, %vm436
      %vm444 = vmand %vm442, %vm437
      %vm445 = vmand %vm442, %vm438
      %vm446 = vmand %vm442, %vm439
      %v447 = vsub.f32 %v410, 10000.0
      %v448 = vsub.f32 %v415, 10000.0
      %v449 = vsub.f32 %v420, 10000.0
      %v450 = vsub.f32 %v425, 10000.0
      %v451 = vsel %vm443, %v447, %v410
      %v452 = vsel %vm444, %v448, %v415
      %v453 = vsel %vm445, %v449, %v420
      %v454 = vsel %vm446, %v450, %v425
      %v455 = vld [vmem:[#allocation2] sm:$0xff]
      %v456 = vld [vmem:[#allocation2 + $0x8] sm:$0xff]
      %v457 = vld [vmem:[#allocation2 + $0x10] sm:$0xff]
      %v458 = vld [vmem:[#allocation2 + $0x18] sm:$0xff]
      %vm459 = vcmask 261120
      %v460 = vsel %vm459, %v451, -inf
      %461 = vmax.xlane.f32.xlu0 %v460
      %v462 = vpop.xlane.xlu0 %461
      %v463 = vsel %vm459, %v452, -inf
      %464 = vmax.xlane.f32.xlu0 %v463
      %v465 = vpop.xlane.xlu0 %464
      %v466 = vsel %vm459, %v453, -inf
      %467 = vmax.xlane.f32.xlu0 %v466
      %v468 = vpop.xlane.xlu0 %467
      %v469 = vsel %vm459, %v454, -inf
      %470 = vmax.xlane.f32.xlu0 %v469
      %v471 = vpop.xlane.xlu0 %470
      %v472 = vmax.f32 %v455, %v462
      %v473 = vmax.f32 %v456, %v465
      %v474 = vmax.f32 %v457, %v468
      %v475 = vmax.f32 %v458, %v471
      %v476 = vsub.f32 %v455, %v472
      %v477 = vsub.f32 %v456, %v473
      %v478 = vsub.f32 %v457, %v474
      %v479 = vsub.f32 %v458, %v475
      %v480 = vmul.f32 %v476, 1.442695
      %v481 = vpow.pop %v480
      %v482 = vmul.f32 %v477, 1.442695
      %v483 = vpow.pop %v482
      %v484 = vmul.f32 %v478, 1.442695
      %v485 = vpow.pop %v484
      %v486 = vmul.f32 %v479, 1.442695
      %v487 = vpow.pop %v486
      %489 = vset.pattern.permute.xlu0 0
      %490 = vperm.xlu0 %489, %v472
      %v491 = vpop.permute.xlu0 %490
      %494 = vset.pattern.permute.xlu0 0
      %495 = vperm.xlu0 %494, %v473
      %v496 = vpop.permute.xlu0 %495
      %499 = vset.pattern.permute.xlu0 0
      %500 = vperm.xlu0 %499, %v474
      %v501 = vpop.permute.xlu0 %500
      %504 = vset.pattern.permute.xlu0 0
      %505 = vperm.xlu0 %504, %v475
      %v506 = vpop.permute.xlu0 %505
      %v508 = vsub.f32 %v451, %v491
      %v509 = vsub.f32 %v452, %v496
      %v510 = vsub.f32 %v453, %v501
      %v511 = vsub.f32 %v454, %v506
      %v512 = vmul.f32 %v508, 1.442695
      %v513 = vpow.pop %v512
      %v514 = vmul.f32 %v509, 1.442695
      %v515 = vpow.pop %v514
      %v516 = vmul.f32 %v510, 1.442695
      %v517 = vpow.pop %v516
      %v518 = vmul.f32 %v511, 1.442695
      %v519 = vpow.pop %v518
      %v520 = vld [vmem:[#allocation3] sm:$0xff]
      %v521 = vld [vmem:[#allocation3 + $0x8] sm:$0xff]
      %v522 = vld [vmem:[#allocation3 + $0x10] sm:$0xff]
      %v523 = vld [vmem:[#allocation3 + $0x18] sm:$0xff]
      %v524 = vmul.f32 %v481, %v520
      %v525 = vmul.f32 %v483, %v521
      %v526 = vmul.f32 %v485, %v522
      %v527 = vmul.f32 %v487, %v523
      %v528 = vsel %vm459, %v513, 0.0
      %529 = vadd.xlane.f32.xlu0 %v528
      %v530 = vpop.xlane.xlu0 %529
      %v531 = vsel %vm459, %v515, 0.0
      %532 = vadd.xlane.f32.xlu0 %v531
      %v533 = vpop.xlane.xlu0 %532
      %v534 = vsel %vm459, %v517, 0.0
      %535 = vadd.xlane.f32.xlu0 %v534
      %v536 = vpop.xlane.xlu0 %535
      %v537 = vsel %vm459, %v519, 0.0
      %538 = vadd.xlane.f32.xlu0 %v537
      %v539 = vpop.xlane.xlu0 %538
      %v540 = vadd.f32 %v524, %v530
      %v541 = vadd.f32 %v525, %v533
      %v542 = vadd.f32 %v526, %v536
      %v543 = vadd.f32 %v527, %v539
      %vm544 = vcmask 7168
      %545 = vst.msk [vmem:[#allocation3] sm:$0xff] %vm544, %v540
      %546 = vst.msk [vmem:[#allocation3 + $0x8] sm:$0xff] %vm544, %v541
      %547 = vst.msk [vmem:[#allocation3 + $0x10] sm:$0xff] %vm544, %v542
      %548 = vst.msk [vmem:[#allocation3 + $0x18] sm:$0xff] %vm544, %v543
      %v549 = vld [vmem:[%s287] sm:$0xff]
      %v550 = vld [vmem:[%s287 + $0x8] sm:$0xff]
      %v551 = vld [vmem:[%s287 + $0x10] sm:$0xff]
      %v552 = vld [vmem:[%s287 + $0x18] sm:$0xff]
      %554 = vset.pattern.permute.xlu0 0
      %555 = vperm.xlu0 %554, %v481
      %v556 = vpop.permute.xlu0 %555
      %559 = vset.pattern.permute.xlu0 0
      %560 = vperm.xlu0 %559, %v483
      %v561 = vpop.permute.xlu0 %560
      %564 = vset.pattern.permute.xlu0 0
      %565 = vperm.xlu0 %564, %v485
      %v566 = vpop.permute.xlu0 %565
      %569 = vset.pattern.permute.xlu0 0
      %570 = vperm.xlu0 %569, %v487
      %v571 = vpop.permute.xlu0 %570
      %v573 = vmul.f32 %v556, %v549
      %v574 = vmul.f32 %v561, %v550
      %v575 = vmul.f32 %v566, %v551
      %v576 = vmul.f32 %v571, %v552
      %v577 = vpack.c.bf16 %v515, %v513
      %v578 = vpack.c.bf16 %v519, %v517
      %v579 = vld [vmem:[%s277] sm:$0xf]
      %v580 = vld [vmem:[%s277 + $0x4] sm:$0xf]
      %v581 = vld [vmem:[%s277 + $0x8] sm:$0xf]
      %v582 = vld [vmem:[%s277 + $0xc] sm:$0xf]
      %v587 = vunpack.c.l.b16 %v579
      %v588 = vunpack.c.l.b16 %v580
      %v589 = vunpack.c.l.b16 %v581
      %v590 = vunpack.c.l.b16 %v582
      %v591 = vpack.c.b16 %v588, %v587
      %v592 = vpack.c.b16 %v590, %v589
      %v596 = vsel %vm459, %v577, 0
      %v599 = vsel %vm459, %v578, 0
      %601 = vmatprep.subr.bf16.mxu0 0
      %602 = vmatpush1.bf16.msra.mxu0 %v591
      %603 = vmatprep.subr.bf16.mxu0 0
      %604 = vmatpush1.bf16.msra.mxu0 %v592
      %605 = vmatprep.subr.bf16.mxu0 0
      %606 = vmatpush1.bf16.msra.mxu0 0
      %607 = vmatprep.subr.bf16.mxu0 0
      %608 = vmatpush1.bf16.msra.mxu0 0
      %609 = vmatprep.subr.bf16.mxu0 0
      %610 = vmatpush1.bf16.msra.mxu0 0
      %611 = vmatprep.subr.bf16.mxu0 0
      %612 = vmatpush1.bf16.msra.mxu0 0
      %613 = vmatprep.subr.bf16.mxu0 0
      %614 = vmatpush1.bf16.msra.mxu0 0
      %615 = vmatprep.subr.bf16.mxu0 0
      %616 = vmatpush1.bf16.msra.mxu0 0
      %617 = vmatprep.subr.bf16.mxu0 0
      %618 = vmatpush1.bf16.msra.mxu0 0
      %619 = vmatprep.subr.bf16.mxu0 0
      %620 = vmatpush1.bf16.msra.mxu0 0
      %621 = vmatprep.subr.bf16.mxu0 0
      %622 = vmatpush1.bf16.msra.mxu0 0
      %623 = vmatprep.subr.bf16.mxu0 0
      %624 = vmatpush1.bf16.msra.mxu0 0
      %625 = vmatprep.subr.bf16.mxu0 0
      %626 = vmatpush1.bf16.msra.mxu0 0
      %627 = vmatprep.subr.bf16.mxu0 0
      %628 = vmatpush1.bf16.msra.mxu0 0
      %629 = vmatprep.subr.bf16.mxu0 0
      %630 = vmatpush1.bf16.msra.mxu0 0
      %631 = vmatprep.subr.bf16.mxu0 0
      %632 = vmatpush1.bf16.msra.mxu0 0
      %633 = vmatprep.mubr.bf16.mxu0 0
      %634 = vmatmul.mubr.bf16.gmra.mrb[0].mxu0 %v596
      %v635 = vpop.f32.mrb[0].mxu0
      %v636 = vadd.f32 0.0, %v635
      %v637 = vpop.f32.mrb[0].mxu0
      %v638 = vpop.f32.mrb[0].mxu0
      %v639 = vadd.f32 0.0, %v638
      %v640 = vpop.f32.mrb[0].mxu0
      %641 = vmatprep.mubr.bf16.mxu0 0
      %642 = vmatmul.mubr.bf16.gmra.mrb[0].mxu0 %v599
      %v643 = vpop.f32.mrb[0].mxu0
      %v644 = vadd.f32 0.0, %v643
      %v645 = vpop.f32.mrb[0].mxu0
      %v646 = vpop.f32.mrb[0].mxu0
      %v647 = vadd.f32 0.0, %v646
      %v648 = vpop.f32.mrb[0].mxu0
      %649 = vdwg.mxu0
      %v650 = vadd.f32 %v573, %v636
      %v651 = vadd.f32 %v574, %v639
      %v652 = vadd.f32 %v575, %v644
      %v653 = vadd.f32 %v576, %v647
      %654 = vst [vmem:[%s287] sm:$0xff] %v650
      %655 = vst [vmem:[%s287 + $0x8] sm:$0xff] %v651
      %656 = vst [vmem:[%s287 + $0x10] sm:$0xff] %v652
      %657 = vst [vmem:[%s287 + $0x18] sm:$0xff] %v653
      %658 = vst.msk [vmem:[#allocation2] sm:$0xff] %vm544, %v472
      %659 = vst.msk [vmem:[#allocation2 + $0x8] sm:$0xff] %vm544, %v473
      %660 = vst.msk [vmem:[#allocation2 + $0x10] sm:$0xff] %vm544, %v474
      %661 = vst.msk [vmem:[#allocation2 + $0x18] sm:$0xff] %vm544, %v475
      %p662 = scmp.eq.s32.totalorder %s21, 1
      // Predicated region
      $region37: #{guided_cxt_atten.4} parent=31 // pred_check
        %p663 = pneg %p662
      $region38: #{guided_cxt_atten.4} parent=31 // pred_check_branch
        %665 = sbr.rel (%p663) target = $region40
      $region39: #{guided_cxt_atten.4} parent=31 // pred_region
        %v666 = vld [vmem:[%s287] sm:$0xff]
        %v667 = vld [vmem:[%s287 + $0x8] sm:$0xff]
        %v668 = vld [vmem:[%s287 + $0x10] sm:$0xff]
        %v669 = vld [vmem:[%s287 + $0x18] sm:$0xff]
        %v670 = vld [vmem:[#allocation3] sm:$0xff]
        %v671 = vld [vmem:[#allocation3 + $0x8] sm:$0xff]
        %v672 = vld [vmem:[#allocation3 + $0x10] sm:$0xff]
        %v673 = vld [vmem:[#allocation3 + $0x18] sm:$0xff]
        %v674 = vrcp.pop %v670
        %v675 = vrcp.pop %v671
        %v676 = vrcp.pop %v672
        %v677 = vrcp.pop %v673
        %v678 = vmul.f32 %v674, 0.25
        %v679 = vmul.f32 %v675, 0.25
        %v680 = vmul.f32 %v676, 0.25
        %v681 = vmul.f32 %v677, 0.25
        %683 = vset.pattern.permute.xlu0 0
        %684 = vperm.xlu0 %683, %v678
        %v685 = vpop.permute.xlu0 %684
        %688 = vset.pattern.permute.xlu0 0
        %689 = vperm.xlu0 %688, %v679
        %v690 = vpop.permute.xlu0 %689
        %693 = vset.pattern.permute.xlu0 0
        %694 = vperm.xlu0 %693, %v680
        %v695 = vpop.permute.xlu0 %694
        %698 = vset.pattern.permute.xlu0 0
        %699 = vperm.xlu0 %698, %v681
        %v700 = vpop.permute.xlu0 %699
        %v702 = vmul.f32 %v666, %v685
        %v703 = vmul.f32 %v667, %v690
        %v704 = vmul.f32 %v668, %v695
        %v705 = vmul.f32 %v669, %v700
        %706 = vst [vmem:[%s287] sm:$0xff] %v702
        %707 = vst [vmem:[%s287 + $0x8] sm:$0xff] %v703
        %708 = vst [vmem:[%s287 + $0x10] sm:$0xff] %v704
        %709 = vst [vmem:[%s287 + $0x18] sm:$0xff] %v705
      $region40: #{guided_cxt_atten.4} parent=31 // pred_fallthru
        _
      %s710 = smul.u32 4, %s20
      %p711 = scmp.lt.s32.totalorder %s19, 1
      %s712 = scalar_select %p711, %s19, 1
      %p713 = scmp.lt.s32.totalorder %s710, 7
      %s714 = scalar_select %p713, %s710, 7
      %s715 = smul.addr %s712, 8
      %s716 = sadd.s32 %s714, %s715
      %s717 = smul.addr %s716, 8
      %s718 = scalar_lea.vmem %s3, %s717
      // Predicated region
      $region41: #{guided_cxt_atten.4} parent=31 // pred_check
        %p719 = pneg %p137
      $region42: #{guided_cxt_atten.4} parent=31 // pred_check_branch
        %721 = sbr.rel (%p719) target = $region44
      $region43: #{guided_cxt_atten.4} parent=31 // pred_region
        %s722 = smul.u32 4, %s20
      $region44: #{guided_cxt_atten.4} parent=31 // pred_fallthru
        _
    $region32: #{guided_cxt_atten.4} parent=5 // pred_fallthru
      _
    %p723 = scmp.le.s32.totalorder 2, %s9
    // Predicated region
    $region45: #{guided_cxt_atten.4} parent=5 // pred_check
      %p724 = pneg %p723
    $region46: #{guided_cxt_atten.4} parent=5 // pred_check_branch
      %726 = sbr.rel (%p724) target = $region48
    $region47: #{guided_cxt_atten.4} parent=5 // pred_region
      %s727 = ssub.s32 %s9, 2
      // Predicated region
      $region49: #{guided_cxt_atten.4} parent=47 // pred_check
        %p728 = pneg %p143
      $region50: #{guided_cxt_atten.4} parent=47 // pred_check_branch
        %730 = sbr.rel (%p728) target = $region52
      $region51: #{guided_cxt_atten.4} parent=47 // pred_region
        %s731 = smul.u32 4, %s23
        %p732 = scmp.lt.s32.totalorder %s22, 1
        %s733 = scalar_select %p732, %s22, 1
        %p734 = scmp.lt.s32.totalorder %s731, 7
        %s735 = scalar_select %p734, %s731, 7
        %s736 = smul.addr %s733, 8
        %s737 = sadd.s32 %s735, %s736
        %s738 = smul.addr %s737, 8
        %s739 = scalar_lea.vmem %s3, %s738
      $region52: #{guided_cxt_atten.4} parent=47 // pred_fallthru
        _
    $region48: #{guided_cxt_atten.4} parent=5 // pred_fallthru
      _
  $region6: #{guided_cxt_atten.4} parent=0 // loop_footer
    %s13 = sadd.s32 1, %s9
  $region7: #{guided_cxt_atten.4} parent=0 // loop_footer_branch
    %8 = sbr.rel target = $region3
  $region8: #{guided_cxt_atten.4} parent=0 // loop_exit
    _

// kernel: guided_cxt_atten.5
$region0: #{guided_cxt_atten.5}
  #allocation0 [shape = 'u32[]', space=smem, size = 0x4, offset = 0x4, fixed_abs, tag = 'smem constant byte address 0x4 - core index']
  #allocation1 [shape = 'u32[144,128]{1,0:T(1,128)}', space=vmem, size = 0x12000, scoped, tag = 'internal scratch']
  %s0 = inlined_call_operand.vmem [shape: f32[512,4], index: 0, kind: input, shape index: {}]
  %s1 = inlined_call_operand.vmem [shape: f32[4,4], index: 1, kind: input, shape index: {}]
  %s2 = inlined_call_operand.vmem [shape: f32[1,4], index: 2, kind: input, shape index: {}]
  %s3 = inlined_call_operand.vmem [shape: f32[512,4], index: 3, kind: output, shape index: {}]
  %s4 = sld [smem:[#allocation0]]
  $region22: #{guided_cxt_atten.5} parent=0
    _
  %s6 = ssub.s32 1, %s4
  %s7 = scalar_select 0, %s6, %s4
  // Predicated region
  $region2: #{guided_cxt_atten.5} parent=0 // pred_check
    _
  $region3: #{guided_cxt_atten.5} parent=0 // pred_check_branch
    %9 = sbr.rel (0) target = $region5
  $region4: #{guided_cxt_atten.5} parent=0 // pred_region
    _
  $region5: #{guided_cxt_atten.5} parent=0 // pred_fallthru
    _
  // Predicated region
  $region6: #{guided_cxt_atten.5} parent=0 // pred_check
    _
  $region7: #{guided_cxt_atten.5} parent=0 // pred_check_branch
    %11 = sbr.rel (0) target = $region9
  $region8: #{guided_cxt_atten.5} parent=0 // pred_region
    _
  $region9: #{guided_cxt_atten.5} parent=0 // pred_fallthru
    _
  // Predicated region
  $region10: #{guided_cxt_atten.5} parent=0 // pred_check
    _
  $region11: #{guided_cxt_atten.5} parent=0 // pred_check_branch
    %13 = sbr.rel (0) target = $region13
  $region12: #{guided_cxt_atten.5} parent=0 // pred_region
    _
  $region13: #{guided_cxt_atten.5} parent=0 // pred_fallthru
    _
  %v14 = vld [vmem:[%s0] sm:$0xff]
  %v15 = vld [vmem:[%s0 + $0x8] sm:$0xff]
  %v16 = vld [vmem:[%s0 + $0x10] sm:$0xff]
  %v17 = vld [vmem:[%s0 + $0x18] sm:$0xff]
  %v18 = vld [vmem:[%s0 + $0x20] sm:$0xff]
  %v19 = vld [vmem:[%s0 + $0x28] sm:$0xff]
  %v20 = vld [vmem:[%s0 + $0x30] sm:$0xff]
  %v21 = vld [vmem:[%s0 + $0x38] sm:$0xff]
  %v22 = vld [vmem:[%s0 + $0x40] sm:$0xff]
  %v23 = vld [vmem:[%s0 + $0x48] sm:$0xff]
  %v24 = vld [vmem:[%s0 + $0x50] sm:$0xff]
  %v25 = vld [vmem:[%s0 + $0x58] sm:$0xff]
  %v26 = vld [vmem:[%s0 + $0x60] sm:$0xff]
  %v27 = vld [vmem:[%s0 + $0x68] sm:$0xff]
  %v28 = vld [vmem:[%s0 + $0x70] sm:$0xff]
  %v29 = vld [vmem:[%s0 + $0x78] sm:$0xff]
  %v30 = vld [vmem:[%s0 + $0x80] sm:$0xff]
  %v31 = vld [vmem:[%s0 + $0x88] sm:$0xff]
  %v32 = vld [vmem:[%s0 + $0x90] sm:$0xff]
  %v33 = vld [vmem:[%s0 + $0x98] sm:$0xff]
  %v34 = vld [vmem:[%s0 + $0xa0] sm:$0xff]
  %v35 = vld [vmem:[%s0 + $0xa8] sm:$0xff]
  %v36 = vld [vmem:[%s0 + $0xb0] sm:$0xff]
  %v37 = vld [vmem:[%s0 + $0xb8] sm:$0xff]
  %v38 = vld [vmem:[%s0 + $0xc0] sm:$0xff]
  %v39 = vld [vmem:[%s0 + $0xc8] sm:$0xff]
  %v40 = vld [vmem:[%s0 + $0xd0] sm:$0xff]
  %v41 = vld [vmem:[%s0 + $0xd8] sm:$0xff]
  %v42 = vld [vmem:[%s0 + $0xe0] sm:$0xff]
  %v43 = vld [vmem:[%s0 + $0xe8] sm:$0xff]
  %v44 = vld [vmem:[%s0 + $0xf0] sm:$0xff]
  %v45 = vld [vmem:[%s0 + $0xf8] sm:$0xff]
  %v46 = vld [vmem:[%s0 + $0x100] sm:$0xff]
  %v47 = vld [vmem:[%s0 + $0x108] sm:$0xff]
  %v48 = vld [vmem:[%s0 + $0x110] sm:$0xff]
  %v49 = vld [vmem:[%s0 + $0x118] sm:$0xff]
  %v50 = vld [vmem:[%s0 + $0x120] sm:$0xff]
  %v51 = vld [vmem:[%s0 + $0x128] sm:$0xff]
  %v52 = vld [vmem:[%s0 + $0x130] sm:$0xff]
  %v53 = vld [vmem:[%s0 + $0x138] sm:$0xff]
  %v54 = vld [vmem:[%s0 + $0x140] sm:$0xff]
  %v55 = vld [vmem:[%s0 + $0x148] sm:$0xff]
  %v56 = vld [vmem:[%s0 + $0x150] sm:$0xff]
  %v57 = vld [vmem:[%s0 + $0x158] sm:$0xff]
  %v58 = vld [vmem:[%s0 + $0x160] sm:$0xff]
  %v59 = vld [vmem:[%s0 + $0x168] sm:$0xff]
  %v60 = vld [vmem:[%s0 + $0x170] sm:$0xff]
  %v61 = vld [vmem:[%s0 + $0x178] sm:$0xff]
  %v62 = vld [vmem:[%s0 + $0x180] sm:$0xff]
  %v63 = vld [vmem:[%s0 + $0x188] sm:$0xff]
  %v64 = vld [vmem:[%s0 + $0x190] sm:$0xff]
  %v65 = vld [vmem:[%s0 + $0x198] sm:$0xff]
  %v66 = vld [vmem:[%s0 + $0x1a0] sm:$0xff]
  %v67 = vld [vmem:[%s0 + $0x1a8] sm:$0xff]
  %v68 = vld [vmem:[%s0 + $0x1b0] sm:$0xff]
  %v69 = vld [vmem:[%s0 + $0x1b8] sm:$0xff]
  %v70 = vld [vmem:[%s0 + $0x1c0] sm:$0xff]
  %v71 = vld [vmem:[%s0 + $0x1c8] sm:$0xff]
  %v72 = vld [vmem:[%s0 + $0x1d0] sm:$0xff]
  %v73 = vld [vmem:[%s0 + $0x1d8] sm:$0xff]
  %v74 = vld [vmem:[%s0 + $0x1e0] sm:$0xff]
  %v75 = vld [vmem:[%s0 + $0x1e8] sm:$0xff]
  %v76 = vld [vmem:[%s0 + $0x1f0] sm:$0xff]
  %v77 = vld [vmem:[%s0 + $0x1f8] sm:$0xff]
  %v78 = vld [vmem:[%s1] sm:$0xf]
  %v79 = vld [vmem:[%s2] sm:$0x1]
  %v81 = vlaneseq
  %v82 = vshrl.u32 %v81, 7
  %v83 = vsub.s32 0, %v82
  %v84 = vrot.slane %v79, %v83
  %vm86 = vcmask 31744
  %v88 = vsel %vm86, %v14, 0
  %v91 = vsel %vm86, %v15, 0
  %v94 = vsel %vm86, %v16, 0
  %v97 = vsel %vm86, %v17, 0
  %v100 = vsel %vm86, %v18, 0
  %v103 = vsel %vm86, %v19, 0
  %v106 = vsel %vm86, %v20, 0
  %v109 = vsel %vm86, %v21, 0
  %v112 = vsel %vm86, %v22, 0
  %v115 = vsel %vm86, %v23, 0
  %v118 = vsel %vm86, %v24, 0
  %v121 = vsel %vm86, %v25, 0
  %v124 = vsel %vm86, %v26, 0
  %v127 = vsel %vm86, %v27, 0
  %v130 = vsel %vm86, %v28, 0
  %v133 = vsel %vm86, %v29, 0
  %v136 = vsel %vm86, %v30, 0
  %v139 = vsel %vm86, %v31, 0
  %v142 = vsel %vm86, %v32, 0
  %v145 = vsel %vm86, %v33, 0
  %v148 = vsel %vm86, %v34, 0
  %v151 = vsel %vm86, %v35, 0
  %v154 = vsel %vm86, %v36, 0
  %v157 = vsel %vm86, %v37, 0
  %v160 = vsel %vm86, %v38, 0
  %v163 = vsel %vm86, %v39, 0
  %v166 = vsel %vm86, %v40, 0
  %v169 = vsel %vm86, %v41, 0
  %v172 = vsel %vm86, %v42, 0
  %v175 = vsel %vm86, %v43, 0
  %v178 = vsel %vm86, %v44, 0
  %v181 = vsel %vm86, %v45, 0
  %v184 = vsel %vm86, %v46, 0
  %v187 = vsel %vm86, %v47, 0
  %v190 = vsel %vm86, %v48, 0
  %v193 = vsel %vm86, %v49, 0
  %v196 = vsel %vm86, %v50, 0
  %v199 = vsel %vm86, %v51, 0
  %v202 = vsel %vm86, %v52, 0
  %v205 = vsel %vm86, %v53, 0
  %v208 = vsel %vm86, %v54, 0
  %v211 = vsel %vm86, %v55, 0
  %v214 = vsel %vm86, %v56, 0
  %v217 = vsel %vm86, %v57, 0
  %v220 = vsel %vm86, %v58, 0
  %v223 = vsel %vm86, %v59, 0
  %v226 = vsel %vm86, %v60, 0
  %v229 = vsel %vm86, %v61, 0
  %v232 = vsel %vm86, %v62, 0
  %v235 = vsel %vm86, %v63, 0
  %v238 = vsel %vm86, %v64, 0
  %v241 = vsel %vm86, %v65, 0
  %v244 = vsel %vm86, %v66, 0
  %v247 = vsel %vm86, %v67, 0
  %v250 = vsel %vm86, %v68, 0
  %v253 = vsel %vm86, %v69, 0
  %v256 = vsel %vm86, %v70, 0
  %v259 = vsel %vm86, %v71, 0
  %v262 = vsel %vm86, %v72, 0
  %v265 = vsel %vm86, %v73, 0
  %v268 = vsel %vm86, %v74, 0
  %v271 = vsel %vm86, %v75, 0
  %v274 = vsel %vm86, %v76, 0
  %v277 = vsel %vm86, %v77, 0
  %vm279 = vcmask 1043456
  %v281 = vsel %vm279, %v78, 0
  %283 = vmatprep.subr.mxu0 0.0
  %284 = vmatpush1.msra.mxu0 %v281
  %285 = vmatprep.subr.mxu0 0.0
  %286 = vmatpush1.msra.mxu0 0.0
  %287 = vmatprep.subr.mxu0 0.0
  %288 = vmatpush1.msra.mxu0 0.0
  %289 = vmatprep.subr.mxu0 0.0
  %290 = vmatpush1.msra.mxu0 0.0
  %291 = vmatprep.subr.mxu0 0.0
  %292 = vmatpush1.msra.mxu0 0.0
  %293 = vmatprep.subr.mxu0 0.0
  %294 = vmatpush1.msra.mxu0 0.0
  %295 = vmatprep.subr.mxu0 0.0
  %296 = vmatpush1.msra.mxu0 0.0
  %297 = vmatprep.subr.mxu0 0.0
  %298 = vmatpush1.msra.mxu0 0.0
  %299 = vmatprep.subr.mxu0 0.0
  %300 = vmatpush1.msra.mxu0 0.0
  %301 = vmatprep.subr.mxu0 0.0
  %302 = vmatpush1.msra.mxu0 0.0
  %303 = vmatprep.subr.mxu0 0.0
  %304 = vmatpush1.msra.mxu0 0.0
  %305 = vmatprep.subr.mxu0 0.0
  %306 = vmatpush1.msra.mxu0 0.0
  %307 = vmatprep.subr.mxu0 0.0
  %308 = vmatpush1.msra.mxu0 0.0
  %309 = vmatprep.subr.mxu0 0.0
  %310 = vmatpush1.msra.mxu0 0.0
  %311 = vmatprep.subr.mxu0 0.0
  %312 = vmatpush1.msra.mxu0 0.0
  %313 = vmatprep.subr.mxu0 0.0
  %314 = vmatpush1.msra.mxu0 0.0
  %315 = vmatprep.subr.mxu0 0.0
  %316 = vmatpush1.msra.mxu0 0.0
  %317 = vmatprep.subr.mxu0 0.0
  %318 = vmatpush1.msra.mxu0 0.0
  %319 = vmatprep.subr.mxu0 0.0
  %320 = vmatpush1.msra.mxu0 0.0
  %321 = vmatprep.subr.mxu0 0.0
  %322 = vmatpush1.msra.mxu0 0.0
  %323 = vmatprep.subr.mxu0 0.0
  %324 = vmatpush1.msra.mxu0 0.0
  %325 = vmatprep.subr.mxu0 0.0
  %326 = vmatpush1.msra.mxu0 0.0
  %327 = vmatprep.subr.mxu0 0.0
  %328 = vmatpush1.msra.mxu0 0.0
  %329 = vmatprep.subr.mxu0 0.0
  %330 = vmatpush1.msra.mxu0 0.0
  %331 = vmatprep.subr.mxu0 0.0
  %332 = vmatpush1.msra.mxu0 0.0
  %333 = vmatprep.subr.mxu0 0.0
  %334 = vmatpush1.msra.mxu0 0.0
  %335 = vmatprep.subr.mxu0 0.0
  %336 = vmatpush1.msra.mxu0 0.0
  %337 = vmatprep.subr.mxu0 0.0
  %338 = vmatpush1.msra.mxu0 0.0
  %339 = vmatprep.subr.mxu0 0.0
  %340 = vmatpush1.msra.mxu0 0.0
  %341 = vmatprep.subr.mxu0 0.0
  %342 = vmatpush1.msra.mxu0 0.0
  %343 = vmatprep.subr.mxu0 0.0
  %344 = vmatpush1.msra.mxu0 0.0
  %345 = vmatprep.subr.mxu0 0.0
  %346 = vmatpush1.msra.mxu0 0.0
  %347 = vmatprep.mubr.f32.mxu0 0.0
  %348 = vmatmul.mubr.f32.gmra.mrb[0].mxu0 %v88
  %v349 = vpop.f32.mrb[0].mxu0
  %v350 = vadd.f32 %v84, %v349
  %v351 = vpop.f32.mrb[0].mxu0
  %352 = vmatprep.mubr.f32.mxu0 0.0
  %353 = vmatmul.mubr.f32.gmra.mrb[0].mxu0 %v91
  %v354 = vpop.f32.mrb[0].mxu0
  %v355 = vadd.f32 %v84, %v354
  %v356 = vpop.f32.mrb[0].mxu0
  %357 = vmatprep.mubr.f32.mxu0 0.0
  %358 = vmatmul.mubr.f32.gmra.mrb[0].mxu0 %v94
  %v359 = vpop.f32.mrb[0].mxu0
  %v360 = vadd.f32 %v84, %v359
  %v361 = vpop.f32.mrb[0].mxu0
  %362 = vmatprep.mubr.f32.mxu0 0.0
  %363 = vmatmul.mubr.f32.gmra.mrb[0].mxu0 %v97
  %v364 = vpop.f32.mrb[0].mxu0
  %v365 = vadd.f32 %v84, %v364
  %v366 = vpop.f32.mrb[0].mxu0
  %367 = vmatprep.mubr.f32.mxu0 0.0
  %368 = vmatmul.mubr.f32.gmra.mrb[0].mxu0 %v100
  %v369 = vpop.f32.mrb[0].mxu0
  %v370 = vadd.f32 %v84, %v369
  %v371 = vpop.f32.mrb[0].mxu0
  %372 = vmatprep.mubr.f32.mxu0 0.0
  %373 = vmatmul.mubr.f32.gmra.mrb[0].mxu0 %v103
  %v374 = vpop.f32.mrb[0].mxu0
  %v375 = vadd.f32 %v84, %v374
  %v376 = vpop.f32.mrb[0].mxu0
  %377 = vmatprep.mubr.f32.mxu0 0.0
  %378 = vmatmul.mubr.f32.gmra.mrb[0].mxu0 %v106
  %v379 = vpop.f32.mrb[0].mxu0
  %v380 = vadd.f32 %v84, %v379
  %v381 = vpop.f32.mrb[0].mxu0
  %382 = vmatprep.mubr.f32.mxu0 0.0
  %383 = vmatmul.mubr.f32.gmra.mrb[0].mxu0 %v109
  %v384 = vpop.f32.mrb[0].mxu0
  %v385 = vadd.f32 %v84, %v384
  %v386 = vpop.f32.mrb[0].mxu0
  %387 = vmatprep.mubr.f32.mxu0 0.0
  %388 = vmatmul.mubr.f32.gmra.mrb[0].mxu0 %v112
  %v389 = vpop.f32.mrb[0].mxu0
  %v390 = vadd.f32 %v84, %v389
  %v391 = vpop.f32.mrb[0].mxu0
  %392 = vmatprep.mubr.f32.mxu0 0.0
  %393 = vmatmul.mubr.f32.gmra.mrb[0].mxu0 %v115
  %v394 = vpop.f32.mrb[0].mxu0
  %v395 = vadd.f32 %v84, %v394
  %v396 = vpop.f32.mrb[0].mxu0
  %397 = vmatprep.mubr.f32.mxu0 0.0
  %398 = vmatmul.mubr.f32.gmra.mrb[0].mxu0 %v118
  %v399 = vpop.f32.mrb[0].mxu0
  %v400 = vadd.f32 %v84, %v399
  %v401 = vpop.f32.mrb[0].mxu0
  %402 = vmatprep.mubr.f32.mxu0 0.0
  %403 = vmatmul.mubr.f32.gmra.mrb[0].mxu0 %v121
  %v404 = vpop.f32.mrb[0].mxu0
  %v405 = vadd.f32 %v84, %v404
  %v406 = vpop.f32.mrb[0].mxu0
  %407 = vmatprep.mubr.f32.mxu0 0.0
  %408 = vmatmul.mubr.f32.gmra.mrb[0].mxu0 %v124
  %v409 = vpop.f32.mrb[0].mxu0
  %v410 = vadd.f32 %v84, %v409
  %v411 = vpop.f32.mrb[0].mxu0
  %412 = vmatprep.mubr.f32.mxu0 0.0
  %413 = vmatmul.mubr.f32.gmra.mrb[0].mxu0 %v127
  %v414 = vpop.f32.mrb[0].mxu0
  %v415 = vadd.f32 %v84, %v414
  %v416 = vpop.f32.mrb[0].mxu0
  %417 = vmatprep.mubr.f32.mxu0 0.0
  %418 = vmatmul.mubr.f32.gmra.mrb[0].mxu0 %v130
  %v419 = vpop.f32.mrb[0].mxu0
  %v420 = vadd.f32 %v84, %v419
  %v421 = vpop.f32.mrb[0].mxu0
  %422 = vmatprep.mubr.f32.mxu0 0.0
  %423 = vmatmul.mubr.f32.gmra.mrb[0].mxu0 %v133
  %v424 = vpop.f32.mrb[0].mxu0
  %v425 = vadd.f32 %v84, %v424
  %v426 = vpop.f32.mrb[0].mxu0
  %427 = vmatprep.mubr.f32.mxu0 0.0
  %428 = vmatmul.mubr.f32.gmra.mrb[0].mxu0 %v136
  %v429 = vpop.f32.mrb[0].mxu0
  %v430 = vadd.f32 %v84, %v429
  %v431 = vpop.f32.mrb[0].mxu0
  %432 = vmatprep.mubr.f32.mxu0 0.0
  %433 = vmatmul.mubr.f32.gmra.mrb[0].mxu0 %v139
  %v434 = vpop.f32.mrb[0].mxu0
  %v435 = vadd.f32 %v84, %v434
  %v436 = vpop.f32.mrb[0].mxu0
  %437 = vmatprep.mubr.f32.mxu0 0.0
  %438 = vmatmul.mubr.f32.gmra.mrb[0].mxu0 %v142
  %v439 = vpop.f32.mrb[0].mxu0
  %v440 = vadd.f32 %v84, %v439
  %v441 = vpop.f32.mrb[0].mxu0
  %442 = vmatprep.mubr.f32.mxu0 0.0
  %443 = vmatmul.mubr.f32.gmra.mrb[0].mxu0 %v145
  %v444 = vpop.f32.mrb[0].mxu0
  %v445 = vadd.f32 %v84, %v444
  %v446 = vpop.f32.mrb[0].mxu0
  %447 = vmatprep.mubr.f32.mxu0 0.0
  %448 = vmatmul.mubr.f32.gmra.mrb[0].mxu0 %v148
  %v449 = vpop.f32.mrb[0].mxu0
  %v450 = vadd.f32 %v84, %v449
  %v451 = vpop.f32.mrb[0].mxu0
  %452 = vmatprep.mubr.f32.mxu0 0.0
  %453 = vmatmul.mubr.f32.gmra.mrb[0].mxu0 %v151
  %v454 = vpop.f32.mrb[0].mxu0
  %v455 = vadd.f32 %v84, %v454
  %v456 = vpop.f32.mrb[0].mxu0
  %457 = vmatprep.mubr.f32.mxu0 0.0
  %458 = vmatmul.mubr.f32.gmra.mrb[0].mxu0 %v154
  %v459 = vpop.f32.mrb[0].mxu0
  %v460 = vadd.f32 %v84, %v459
  %v461 = vpop.f32.mrb[0].mxu0
  %462 = vmatprep.mubr.f32.mxu0 0.0
  %463 = vmatmul.mubr.f32.gmra.mrb[0].mxu0 %v157
  %v464 = vpop.f32.mrb[0].mxu0
  %v465 = vadd.f32 %v84, %v464
  %v466 = vpop.f32.mrb[0].mxu0
  %467 = vmatprep.mubr.f32.mxu0 0.0
  %468 = vmatmul.mubr.f32.gmra.mrb[0].mxu0 %v160
  %v469 = vpop.f32.mrb[0].mxu0
  %v470 = vadd.f32 %v84, %v469
  %v471 = vpop.f32.mrb[0].mxu0
  %472 = vmatprep.mubr.f32.mxu0 0.0
  %473 = vmatmul.mubr.f32.gmra.mrb[0].mxu0 %v163
  %v474 = vpop.f32.mrb[0].mxu0
  %v475 = vadd.f32 %v84, %v474
  %v476 = vpop.f32.mrb[0].mxu0
  %477 = vmatprep.mubr.f32.mxu0 0.0
  %478 = vmatmul.mubr.f32.gmra.mrb[0].mxu0 %v166
  %v479 = vpop.f32.mrb[0].mxu0
  %v480 = vadd.f32 %v84, %v479
  %v481 = vpop.f32.mrb[0].mxu0
  %482 = vmatprep.mubr.f32.mxu0 0.0
  %483 = vmatmul.mubr.f32.gmra.mrb[0].mxu0 %v169
  %v484 = vpop.f32.mrb[0].mxu0
  %v485 = vadd.f32 %v84, %v484
  %v486 = vpop.f32.mrb[0].mxu0
  %487 = vmatprep.mubr.f32.mxu0 0.0
  %488 = vmatmul.mubr.f32.gmra.mrb[0].mxu0 %v172
  %v489 = vpop.f32.mrb[0].mxu0
  %v490 = vadd.f32 %v84, %v489
  %v491 = vpop.f32.mrb[0].mxu0
  %492 = vmatprep.mubr.f32.mxu0 0.0
  %493 = vmatmul.mubr.f32.gmra.mrb[0].mxu0 %v175
  %v494 = vpop.f32.mrb[0].mxu0
  %v495 = vadd.f32 %v84, %v494
  %v496 = vpop.f32.mrb[0].mxu0
  %497 = vmatprep.mubr.f32.mxu0 0.0
  %498 = vmatmul.mubr.f32.gmra.mrb[0].mxu0 %v178
  %v499 = vpop.f32.mrb[0].mxu0
  %v500 = vadd.f32 %v84, %v499
  %v501 = vpop.f32.mrb[0].mxu0
  %502 = vmatprep.mubr.f32.mxu0 0.0
  %503 = vmatmul.mubr.f32.gmra.mrb[0].mxu0 %v181
  %v504 = vpop.f32.mrb[0].mxu0
  %v505 = vadd.f32 %v84, %v504
  %v506 = vpop.f32.mrb[0].mxu0
  %507 = vmatprep.mubr.f32.mxu0 0.0
  %508 = vmatmul.mubr.f32.gmra.mrb[0].mxu0 %v184
  %v509 = vpop.f32.mrb[0].mxu0
  %v510 = vadd.f32 %v84, %v509
  %v511 = vpop.f32.mrb[0].mxu0
  %512 = vmatprep.mubr.f32.mxu0 0.0
  %513 = vmatmul.mubr.f32.gmra.mrb[0].mxu0 %v187
  %v514 = vpop.f32.mrb[0].mxu0
  %v515 = vadd.f32 %v84, %v514
  %v516 = vpop.f32.mrb[0].mxu0
  %517 = vmatprep.mubr.f32.mxu0 0.0
  %518 = vmatmul.mubr.f32.gmra.mrb[0].mxu0 %v190
  %v519 = vpop.f32.mrb[0].mxu0
  %v520 = vadd.f32 %v84, %v519
  %v521 = vpop.f32.mrb[0].mxu0
  %522 = vmatprep.mubr.f32.mxu0 0.0
  %523 = vmatmul.mubr.f32.gmra.mrb[0].mxu0 %v193
  %v524 = vpop.f32.mrb[0].mxu0
  %v525 = vadd.f32 %v84, %v524
  %v526 = vpop.f32.mrb[0].mxu0
  %527 = vmatprep.mubr.f32.mxu0 0.0
  %528 = vmatmul.mubr.f32.gmra.mrb[0].mxu0 %v196
  %v529 = vpop.f32.mrb[0].mxu0
  %v530 = vadd.f32 %v84, %v529
  %v531 = vpop.f32.mrb[0].mxu0
  %532 = vmatprep.mubr.f32.mxu0 0.0
  %533 = vmatmul.mubr.f32.gmra.mrb[0].mxu0 %v199
  %v534 = vpop.f32.mrb[0].mxu0
  %v535 = vadd.f32 %v84, %v534
  %v536 = vpop.f32.mrb[0].mxu0
  %537 = vmatprep.mubr.f32.mxu0 0.0
  %538 = vmatmul.mubr.f32.gmra.mrb[0].mxu0 %v202
  %v539 = vpop.f32.mrb[0].mxu0
  %v540 = vadd.f32 %v84, %v539
  %v541 = vpop.f32.mrb[0].mxu0
  %542 = vmatprep.mubr.f32.mxu0 0.0
  %543 = vmatmul.mubr.f32.gmra.mrb[0].mxu0 %v205
  %v544 = vpop.f32.mrb[0].mxu0
  %v545 = vadd.f32 %v84, %v544
  %v546 = vpop.f32.mrb[0].mxu0
  %547 = vmatprep.mubr.f32.mxu0 0.0
  %548 = vmatmul.mubr.f32.gmra.mrb[0].mxu0 %v208
  %v549 = vpop.f32.mrb[0].mxu0
  %v550 = vadd.f32 %v84, %v549
  %v551 = vpop.f32.mrb[0].mxu0
  %552 = vmatprep.mubr.f32.mxu0 0.0
  %553 = vmatmul.mubr.f32.gmra.mrb[0].mxu0 %v211
  %v554 = vpop.f32.mrb[0].mxu0
  %v555 = vadd.f32 %v84, %v554
  %v556 = vpop.f32.mrb[0].mxu0
  %557 = vmatprep.mubr.f32.mxu0 0.0
  %558 = vmatmul.mubr.f32.gmra.mrb[0].mxu0 %v214
  %v559 = vpop.f32.mrb[0].mxu0
  %v560 = vadd.f32 %v84, %v559
  %v561 = vpop.f32.mrb[0].mxu0
  %562 = vmatprep.mubr.f32.mxu0 0.0
  %563 = vmatmul.mubr.f32.gmra.mrb[0].mxu0 %v217
  %v564 = vpop.f32.mrb[0].mxu0
  %v565 = vadd.f32 %v84, %v564
  %v566 = vpop.f32.mrb[0].mxu0
  %567 = vmatprep.mubr.f32.mxu0 0.0
  %568 = vmatmul.mubr.f32.gmra.mrb[0].mxu0 %v220
  %v569 = vpop.f32.mrb[0].mxu0
  %v570 = vadd.f32 %v84, %v569
  %v571 = vpop.f32.mrb[0].mxu0
  %572 = vmatprep.mubr.f32.mxu0 0.0
  %573 = vmatmul.mubr.f32.gmra.mrb[0].mxu0 %v223
  %v574 = vpop.f32.mrb[0].mxu0
  %v575 = vadd.f32 %v84, %v574
  %v576 = vpop.f32.mrb[0].mxu0
  %577 = vmatprep.mubr.f32.mxu0 0.0
  %578 = vmatmul.mubr.f32.gmra.mrb[0].mxu0 %v226
  %v579 = vpop.f32.mrb[0].mxu0
  %v580 = vadd.f32 %v84, %v579
  %v581 = vpop.f32.mrb[0].mxu0
  %582 = vmatprep.mubr.f32.mxu0 0.0
  %583 = vmatmul.mubr.f32.gmra.mrb[0].mxu0 %v229
  %v584 = vpop.f32.mrb[0].mxu0
  %v585 = vadd.f32 %v84, %v584
  %v586 = vpop.f32.mrb[0].mxu0
  %587 = vmatprep.mubr.f32.mxu0 0.0
  %588 = vmatmul.mubr.f32.gmra.mrb[0].mxu0 %v232
  %v589 = vpop.f32.mrb[0].mxu0
  %v590 = vadd.f32 %v84, %v589
  %v591 = vpop.f32.mrb[0].mxu0
  %592 = vmatprep.mubr.f32.mxu0 0.0
  %593 = vmatmul.mubr.f32.gmra.mrb[0].mxu0 %v235
  %v594 = vpop.f32.mrb[0].mxu0
  %v595 = vadd.f32 %v84, %v594
  %v596 = vpop.f32.mrb[0].mxu0
  %597 = vmatprep.mubr.f32.mxu0 0.0
  %598 = vmatmul.mubr.f32.gmra.mrb[0].mxu0 %v238
  %v599 = vpop.f32.mrb[0].mxu0
  %v600 = vadd.f32 %v84, %v599
  %v601 = vpop.f32.mrb[0].mxu0
  %602 = vmatprep.mubr.f32.mxu0 0.0
  %603 = vmatmul.mubr.f32.gmra.mrb[0].mxu0 %v241
  %v604 = vpop.f32.mrb[0].mxu0
  %v605 = vadd.f32 %v84, %v604
  %v606 = vpop.f32.mrb[0].mxu0
  %607 = vmatprep.mubr.f32.mxu0 0.0
  %608 = vmatmul.mubr.f32.gmra.mrb[0].mxu0 %v244
  %v609 = vpop.f32.mrb[0].mxu0
  %v610 = vadd.f32 %v84, %v609
  %v611 = vpop.f32.mrb[0].mxu0
  %612 = vmatprep.mubr.f32.mxu0 0.0
  %613 = vmatmul.mubr.f32.gmra.mrb[0].mxu0 %v247
  %v614 = vpop.f32.mrb[0].mxu0
  %v615 = vadd.f32 %v84, %v614
  %v616 = vpop.f32.mrb[0].mxu0
  %617 = vmatprep.mubr.f32.mxu0 0.0
  %618 = vmatmul.mubr.f32.gmra.mrb[0].mxu0 %v250
  %v619 = vpop.f32.mrb[0].mxu0
  %v620 = vadd.f32 %v84, %v619
  %v621 = vpop.f32.mrb[0].mxu0
  %622 = vmatprep.mubr.f32.mxu0 0.0
  %623 = vmatmul.mubr.f32.gmra.mrb[0].mxu0 %v253
  %v624 = vpop.f32.mrb[0].mxu0
  %v625 = vadd.f32 %v84, %v624
  %v626 = vpop.f32.mrb[0].mxu0
  %627 = vmatprep.mubr.f32.mxu0 0.0
  %628 = vmatmul.mubr.f32.gmra.mrb[0].mxu0 %v256
  %v629 = vpop.f32.mrb[0].mxu0
  %v630 = vadd.f32 %v84, %v629
  %v631 = vpop.f32.mrb[0].mxu0
  %632 = vmatprep.mubr.f32.mxu0 0.0
  %633 = vmatmul.mubr.f32.gmra.mrb[0].mxu0 %v259
  %v634 = vpop.f32.mrb[0].mxu0
  %v635 = vadd.f32 %v84, %v634
  %v636 = vpop.f32.mrb[0].mxu0
  %637 = vmatprep.mubr.f32.mxu0 0.0
  %638 = vmatmul.mubr.f32.gmra.mrb[0].mxu0 %v262
  %v639 = vpop.f32.mrb[0].mxu0
  %v640 = vadd.f32 %v84, %v639
  %v641 = vpop.f32.mrb[0].mxu0
  %642 = vmatprep.mubr.f32.mxu0 0.0
  %643 = vmatmul.mubr.f32.gmra.mrb[0].mxu0 %v265
  %v644 = vpop.f32.mrb[0].mxu0
  %v645 = vadd.f32 %v84, %v644
  %v646 = vpop.f32.mrb[0].mxu0
  %647 = vmatprep.mubr.f32.mxu0 0.0
  %648 = vmatmul.mubr.f32.gmra.mrb[0].mxu0 %v268
  %v649 = vpop.f32.mrb[0].mxu0
  %v650 = vadd.f32 %v84, %v649
  %v651 = vpop.f32.mrb[0].mxu0
  %652 = vmatprep.mubr.f32.mxu0 0.0
  %653 = vmatmul.mubr.f32.gmra.mrb[0].mxu0 %v271
  %v654 = vpop.f32.mrb[0].mxu0
  %v655 = vadd.f32 %v84, %v654
  %v656 = vpop.f32.mrb[0].mxu0
  %657 = vmatprep.mubr.f32.mxu0 0.0
  %658 = vmatmul.mubr.f32.gmra.mrb[0].mxu0 %v274
  %v659 = vpop.f32.mrb[0].mxu0
  %v660 = vadd.f32 %v84, %v659
  %v661 = vpop.f32.mrb[0].mxu0
  %662 = vmatprep.mubr.f32.mxu0 0.0
  %663 = vmatmul.mubr.f32.gmra.mrb[0].mxu0 %v277
  %v664 = vpop.f32.mrb[0].mxu0
  %v665 = vadd.f32 %v84, %v664
  %v666 = vpop.f32.mrb[0].mxu0
  %667 = vdwg.mxu0
  %668 = vst.msk [vmem:[%s3] sm:$0xff] %vm86, %v350
  %669 = vst.msk [vmem:[%s3 + $0x8] sm:$0xff] %vm86, %v355
  %670 = vst.msk [vmem:[%s3 + $0x10] sm:$0xff] %vm86, %v360
  %671 = vst.msk [vmem:[%s3 + $0x18] sm:$0xff] %vm86, %v365
  %672 = vst.msk [vmem:[%s3 + $0x20] sm:$0xff] %vm86, %v370
  %673 = vst.msk [vmem:[%s3 + $0x28] sm:$0xff] %vm86, %v375
  %674 = vst.msk [vmem:[%s3 + $0x30] sm:$0xff] %vm86, %v380
  %675 = vst.msk [vmem:[%s3 + $0x38] sm:$0xff] %vm86, %v385
  %676 = vst.msk [vmem:[%s3 + $0x40] sm:$0xff] %vm86, %v390
  %677 = vst.msk [vmem:[%s3 + $0x48] sm:$0xff] %vm86, %v395
  %678 = vst.msk [vmem:[%s3 + $0x50] sm:$0xff] %vm86, %v400
  %679 = vst.msk [vmem:[%s3 + $0x58] sm:$0xff] %vm86, %v405
  %680 = vst.msk [vmem:[%s3 + $0x60] sm:$0xff] %vm86, %v410
  %681 = vst.msk [vmem:[%s3 + $0x68] sm:$0xff] %vm86, %v415
  %682 = vst.msk [vmem:[%s3 + $0x70] sm:$0xff] %vm86, %v420
  %683 = vst.msk [vmem:[%s3 + $0x78] sm:$0xff] %vm86, %v425
  %684 = vst.msk [vmem:[%s3 + $0x80] sm:$0xff] %vm86, %v430
  %685 = vst.msk [vmem:[%s3 + $0x88] sm:$0xff] %vm86, %v435
  %686 = vst.msk [vmem:[%s3 + $0x90] sm:$0xff] %vm86, %v440
  %687 = vst.msk [vmem:[%s3 + $0x98] sm:$0xff] %vm86, %v445
  %688 = vst.msk [vmem:[%s3 + $0xa0] sm:$0xff] %vm86, %v450
  %689 = vst.msk [vmem:[%s3 + $0xa8] sm:$0xff] %vm86, %v455
  %690 = vst.msk [vmem:[%s3 + $0xb0] sm:$0xff] %vm86, %v460
  %691 = vst.msk [vmem:[%s3 + $0xb8] sm:$0xff] %vm86, %v465
  %692 = vst.msk [vmem:[%s3 + $0xc0] sm:$0xff] %vm86, %v470
  %693 = vst.msk [vmem:[%s3 + $0xc8] sm:$0xff] %vm86, %v475
  %694 = vst.msk [vmem:[%s3 + $0xd0] sm:$0xff] %vm86, %v480
  %695 = vst.msk [vmem:[%s3 + $0xd8] sm:$0xff] %vm86, %v485
  %696 = vst.msk [vmem:[%s3 + $0xe0] sm:$0xff] %vm86, %v490
  %697 = vst.msk [vmem:[%s3 + $0xe8] sm:$0xff] %vm86, %v495
  %698 = vst.msk [vmem:[%s3 + $0xf0] sm:$0xff] %vm86, %v500
  %699 = vst.msk [vmem:[%s3 + $0xf8] sm:$0xff] %vm86, %v505
  %700 = vst.msk [vmem:[%s3 + $0x100] sm:$0xff] %vm86, %v510
  %701 = vst.msk [vmem:[%s3 + $0x108] sm:$0xff] %vm86, %v515
  %702 = vst.msk [vmem:[%s3 + $0x110] sm:$0xff] %vm86, %v520
  %703 = vst.msk [vmem:[%s3 + $0x118] sm:$0xff] %vm86, %v525
  %704 = vst.msk [vmem:[%s3 + $0x120] sm:$0xff] %vm86, %v530
  %705 = vst.msk [vmem:[%s3 + $0x128] sm:$0xff] %vm86, %v535
  %706 = vst.msk [vmem:[%s3 + $0x130] sm:$0xff] %vm86, %v540
  %707 = vst.msk [vmem:[%s3 + $0x138] sm:$0xff] %vm86, %v545
  %708 = vst.msk [vmem:[%s3 + $0x140] sm:$0xff] %vm86, %v550
  %709 = vst.msk [vmem:[%s3 + $0x148] sm:$0xff] %vm86, %v555
  %710 = vst.msk [vmem:[%s3 + $0x150] sm:$0xff] %vm86, %v560
  %711 = vst.msk [vmem:[%s3 + $0x158] sm:$0xff] %vm86, %v565
  %712 = vst.msk [vmem:[%s3 + $0x160] sm:$0xff] %vm86, %v570
  %713 = vst.msk [vmem:[%s3 + $0x168] sm:$0xff] %vm86, %v575
  %714 = vst.msk [vmem:[%s3 + $0x170] sm:$0xff] %vm86, %v580
  %715 = vst.msk [vmem:[%s3 + $0x178] sm:$0xff] %vm86, %v585
  %716 = vst.msk [vmem:[%s3 + $0x180] sm:$0xff] %vm86, %v590
  %717 = vst.msk [vmem:[%s3 + $0x188] sm:$0xff] %vm86, %v595
  %718 = vst.msk [vmem:[%s3 + $0x190] sm:$0xff] %vm86, %v600
  %719 = vst.msk [vmem:[%s3 + $0x198] sm:$0xff] %vm86, %v605
  %720 = vst.msk [vmem:[%s3 + $0x1a0] sm:$0xff] %vm86, %v610
  %721 = vst.msk [vmem:[%s3 + $0x1a8] sm:$0xff] %vm86, %v615
  %722 = vst.msk [vmem:[%s3 + $0x1b0] sm:$0xff] %vm86, %v620
  %723 = vst.msk [vmem:[%s3 + $0x1b8] sm:$0xff] %vm86, %v625
  %724 = vst.msk [vmem:[%s3 + $0x1c0] sm:$0xff] %vm86, %v630
  %725 = vst.msk [vmem:[%s3 + $0x1c8] sm:$0xff] %vm86, %v635
  %726 = vst.msk [vmem:[%s3 + $0x1d0] sm:$0xff] %vm86, %v640
  %727 = vst.msk [vmem:[%s3 + $0x1d8] sm:$0xff] %vm86, %v645
  %728 = vst.msk [vmem:[%s3 + $0x1e0] sm:$0xff] %vm86, %v650
  %729 = vst.msk [vmem:[%s3 + $0x1e8] sm:$0xff] %vm86, %v655
  %730 = vst.msk [vmem:[%s3 + $0x1f0] sm:$0xff] %vm86, %v660
  %731 = vst.msk [vmem:[%s3 + $0x1f8] sm:$0xff] %vm86, %v665
  // Predicated region
  $region14: #{guided_cxt_atten.5} parent=0 // pred_check
    _
  $region15: #{guided_cxt_atten.5} parent=0 // pred_check_branch
    %733 = sbr.rel (0) target = $region17
  $region16: #{guided_cxt_atten.5} parent=0 // pred_region
    _
  $region17: #{guided_cxt_atten.5} parent=0 // pred_fallthru
    _
  // Predicated region
  $region18: #{guided_cxt_atten.5} parent=0 // pred_check
    _
  $region19: #{guided_cxt_atten.5} parent=0 // pred_check_branch
    %735 = sbr.rel (0) target = $region21
  $region20: #{guided_cxt_atten.5} parent=0 // pred_region
    _
  $region21: #{guided_cxt_atten.5} parent=0 // pred_fallthru
    _

</llo_original>
